<compile_context>
chip_gen: v6e
topology: v6e:2x2x1
jax: 0.10.0
libtpu: 0.0.40
codegen_flags: <defaults>
</compile_context>

<pallas_src>
import jax
import jax.numpy as jnp
from jax import lax
from jax.experimental import pallas as pl
from jax.experimental.pallas import tpu as pltpu

# Fixed geometry of the PyTorch model (10x10 input, fc1 expects 60 = 30+30).
C1 = 20            # conv1 out channels
C2 = 30            # conv2 out channels
S1 = 16            # 4x4 pooled positions after conv1+pool
G1 = 384           # lane group for conv1 stage (S1*C1 = 320 used, padded to 3*128)
G2P = 32           # packed lane group for conv2 stage (C2 = 30 used, padded to 32)
HW = 100           # flattened 10x10 image


# ----------------------------------------------------------------------------
# Single fused Pallas kernel: conv towers + item segment-sum + fc1/fc2/fc3 + softmax
# ----------------------------------------------------------------------------
def policy_kernel(bin_ref, item_ref, wc1_ref, wc2_ref, w1_ref, w2_ref, w3_ref,
                  bias_ref, o_ref):
    KG1 = 4 * G1                       # 1536 lanes per tower in the conv1 slab

    def tower(x_bf16, w1e, b1e, w2e, b2e):
        # conv1 + 2x2 maxpool + bias + ReLU: ONE matmul, 4 pool groups of G1 lanes.
        y = jnp.dot(x_bf16, w1e, preferred_element_type=jnp.float32)      # (M, 4*G1)
        p = jnp.maximum(jnp.maximum(y[:, 0:G1], y[:, G1:2 * G1]),
                        jnp.maximum(y[:, 2 * G1:3 * G1], y[:, 3 * G1:4 * G1]))
        f = jnp.maximum(p + b1e, 0.0)                                      # (M, G1)
        # conv2 + 2x2 maxpool + bias + ReLU: ONE matmul, 4 pool groups of 32 lanes
        # packed inside a single 128-lane group (no zero-padded lanes streamed).
        z = jnp.dot(f.astype(jnp.bfloat16), w2e,
                    preferred_element_type=jnp.float32)                    # (M, 128)
        q = jnp.maximum(jnp.maximum(z[:, 0:G2P], z[:, G2P:2 * G2P]),
                        jnp.maximum(z[:, 2 * G2P:3 * G2P], z[:, 3 * G2P:4 * G2P]))
        return jnp.maximum(q + b2e, 0.0)                                   # (M, 32)

    bin_f = tower(bin_ref[...].astype(jnp.bfloat16),
                  wc1_ref[:, 0:KG1], bias_ref[0:1, :],
                  wc2_ref[:, 0:128], bias_ref[5:6, 0:G2P])                 # (B, 32)
    item_f = tower(item_ref[...].astype(jnp.bfloat16),
                   wc1_ref[:, KG1:2 * KG1], bias_ref[1:2, :],
                   wc2_ref[:, 128:256], bias_ref[6:7, 0:G2P])              # (B*n, 32)

    # Per-item sum as ONE MXU segment-sum matmul (no unaligned sublane slices,
    # no concatenate-induced copies; scales with B).
    B = bin_ref.shape[0]
    n_tot = item_ref.shape[0]
    n_item = n_tot // B
    row = lax.broadcasted_iota(jnp.int32, (B, n_tot), 0)
    col = lax.broadcasted_iota(jnp.int32, (B, n_tot), 1)
    seg = jnp.where((col >= row * n_item) & (col < (row + 1) * n_item), 1.0, 0.0)
    item_sum = jnp.dot(seg, item_f, preferred_element_type=jnp.float32)    # (B, 32)

    # Fused fc1 over the lane-concat [item_sum | bin_f]: (B, 64) @ (64, 200).
    cat = jnp.concatenate([item_sum, bin_f], axis=1).astype(jnp.bfloat16)
    h = jnp.dot(cat, w1_ref[...], preferred_element_type=jnp.float32) \
        + bias_ref[2:3, 0:200]
    h = jnp.maximum(h, 0.0)
    h = jnp.dot(h.astype(jnp.bfloat16), w2_ref[...],
                preferred_element_type=jnp.float32) + bias_ref[3:4, 0:200]
    h = jnp.maximum(h, 0.0)
    logits = jnp.dot(h.astype(jnp.bfloat16), w3_ref[...],
                     preferred_element_type=jnp.float32) + bias_ref[4:5, 0:20]

    # Softmax with an exact divide so output rows sum to 1 (sampler downstream).
    m = jnp.max(logits, axis=1, keepdims=True)
    e = jnp.exp(logits - m)
    o_ref[...] = e / jnp.sum(e, axis=1, keepdims=True)


# ----------------------------------------------------------------------------
# One-time weight preparation (pure JAX, run once outside the hot path):
# fold conv kernels + pool-window replication into lane-aligned matmul weights.
# ----------------------------------------------------------------------------
def _expand_conv1(w):
    """(20,1,3,3) OIHW -> (100, 4*G1). Column q = (pool_pos a)*G1 + s*20 + ch."""
    q = jnp.arange(4 * G1)
    a, rem = q // G1, q % G1
    ch, s = rem % C1, rem // C1
    pi, pj = s // 4, s % 4
    u0 = 2 * pi + a // 2                      # input row of the patch origin
    v0 = 2 * pj + a % 2                       # input col of the patch origin
    pidx = jnp.arange(HW)
    i, j = pidx // 10, pidx % 10
    di = i[:, None] - u0[None, :]
    dj = j[:, None] - v0[None, :]
    valid = ((di >= 0) & (di < 3) & (dj >= 0) & (dj < 3)
             & (rem[None, :] < S1 * C1))
    kidx = jnp.clip(di, 0, 2) * 3 + jnp.clip(dj, 0, 2)
    vals = w.reshape(C1, 9)[ch[None, :], kidx]
    return jnp.where(valid, vals, 0.0).astype(jnp.float32)              # (100, 1536)


def _expand_conv2(w):
    """(30,20,3,3) OIHW -> (G1, 128). Row p = s*20 + ci, col q = a*32 + co."""
    pidx = jnp.arange(G1)
    ci, s = pidx % C1, pidx // C1
    r, c = s // 4, s % 4
    q = jnp.arange(4 * G2P)                   # 128
    a, rem = q // G2P, q % G2P
    oi, oj = a // 2, a % 2
    di = r[:, None] - oi[None, :]
    dj = c[:, None] - oj[None, :]
    valid = ((di >= 0) & (di < 3) & (dj >= 0) & (dj < 3)
             & (rem[None, :] < C2) & (s[:, None] < S1))
    kidx = jnp.clip(di, 0, 2) * 3 + jnp.clip(dj, 0, 2)
    co = jnp.clip(rem, 0, C2 - 1)
    vals = w.reshape(C2, C1, 9)[co[None, :], ci[:, None], kidx]
    return jnp.where(valid, vals, 0.0).astype(jnp.float32)              # (384, 128)


def _expand_bias1(b):
    return jnp.pad(jnp.tile(b, S1), (0, G1 - S1 * C1)).reshape(1, G1).astype(jnp.float32)


def prepare_params(p):
    """PyTorch-shaped params -> kernel-ready packed slabs (bf16 weights)."""
    # Conv expanded weights: both towers share one slab each (lane concat at a
    # 128-aligned offset -> free in-kernel slices, one DMA descriptor).
    wc1 = jnp.concatenate([_expand_conv1(p["cb_w1"]),
                           _expand_conv1(p["ci_w1"])], axis=1)          # (100, 3072)
    wc2 = jnp.concatenate([_expand_conv2(p["cb_w2"]),
                           _expand_conv2(p["ci_w2"])], axis=1)          # (384, 256)
    # Fused fc1 weight: rows 0:30 multiply item_sum lanes, rows 32:62 bin lanes.
    w1 = jnp.zeros((2 * G2P, 200), jnp.float32)
    w1 = w1.at[0:C2, :].set(p["fc1_w"][:, :C2].T)
    w1 = w1.at[G2P:G2P + C2, :].set(p["fc1_w"][:, C2:].T)
    # All bias vectors packed into one (8, 384) f32 slab (one DMA descriptor).
    bias = jnp.zeros((8, G1), jnp.float32)
    bias = bias.at[0:1, :].set(_expand_bias1(p["cb_b1"]))
    bias = bias.at[1:2, :].set(_expand_bias1(p["ci_b1"]))
    bias = bias.at[2, 0:200].set(p["fc1_b"])
    bias = bias.at[3, 0:200].set(p["fc2_b"])
    bias = bias.at[4, 0:20].set(p["fc3_b"])
    bias = bias.at[5, 0:C2].set(p["cb_b2"])
    bias = bias.at[6, 0:C2].set(p["ci_b2"])
    return dict(
        wc1=wc1.astype(jnp.bfloat16), wc2=wc2.astype(jnp.bfloat16),
        w1=w1.astype(jnp.bfloat16),
        w2=p["fc2_w"].T.astype(jnp.bfloat16),                           # (200, 200)
        w3=p["fc3_w"].T.astype(jnp.bfloat16),                           # (200, 20)
        bias=bias,
    )


# ----------------------------------------------------------------------------
# Forward wrapper: minimal layout glue + a single pallas_call (8 operands)
# ----------------------------------------------------------------------------
def policy_forward(x, kp):
    """x: (B, 10, 10, 1 + n_item) float32 -> (B, 20) softmax probabilities."""
    B, H, W, C = x.shape
    n_item = C - 1
    bin_flat = x[..., 0].reshape(B, H * W)                               # (B, 100)
    item_flat = jnp.transpose(x[..., 1:], (0, 3, 1, 2)).reshape(B * n_item, H * W)

    vmem = pl.BlockSpec(memory_space=pltpu.MemorySpace.VMEM)
    return pl.pallas_call(
        policy_kernel,
        out_shape=jax.ShapeDtypeStruct((B, 20), jnp.float32),
        in_specs=[vmem] * 8,
        out_specs=vmem,
    )(bin_flat, item_flat,
      kp["wc1"], kp["wc2"], kp["w1"], kp["w2"], kp["w3"], kp["bias"])


# ----------------------------------------------------------------------------
# Deterministic parameter init (PyTorch shapes, uniform(+-1/sqrt(fan_in)))
# ----------------------------------------------------------------------------
def init_params(key):
    ks = jax.random.split(key, 14)

    def u(k, shape, fan_in):
        b = 1.0 / (fan_in ** 0.5)
        return jax.random.uniform(k, shape, jnp.float32, -b, b)

    return dict(
        cb_w1=u(ks[0], (20, 1, 3, 3), 9),    cb_b1=u(ks[1], (20,), 9),
        cb_w2=u(ks[2], (30, 20, 3, 3), 180), cb_b2=u(ks[3], (30,), 180),
        ci_w1=u(ks[4], (20, 1, 3, 3), 9),    ci_b1=u(ks[5], (20,), 9),
        ci_w2=u(ks[6], (30, 20, 3, 3), 180), ci_b2=u(ks[7], (30,), 180),
        fc1_w=u(ks[8], (200, 60), 60),   fc1_b=u(ks[9], (200,), 60),
        fc2_w=u(ks[10], (200, 200), 200), fc2_b=u(ks[11], (200,), 200),
        fc3_w=u(ks[12], (20, 200), 200),  fc3_b=u(ks[13], (20,), 200),
    )


# ----------------------------------------------------------------------------
# Pure-JAX reference (for correctness check only)
# ----------------------------------------------------------------------------
def _conv_tower_ref(imgs, w1, b1, w2, b2):
    y = imgs[:, None, :, :]                                     # NCHW
    y = lax.conv_general_dilated(y, w1, (1, 1), "VALID",
                                 precision=lax.Precision.HIGHEST)
    y = jnp.maximum(y + b1[None, :, None, None], 0.0)
    y = lax.reduce_window(y, -jnp.inf, lax.max, (1, 1, 2, 2), (1, 1, 2, 2), "VALID")
    y = lax.conv_general_dilated(y, w2, (1, 1), "VALID",
                                 precision=lax.Precision.HIGHEST)
    y = jnp.maximum(y + b2[None, :, None, None], 0.0)
    y = lax.reduce_window(y, -jnp.inf, lax.max, (1, 1, 2, 2), (1, 1, 2, 2), "VALID")
    return y.reshape(y.shape[0], -1)


def policy_reference(x, p):
    B, H, W, C = x.shape
    n_item = C - 1
    bin_img = x[..., 0]
    item_img = jnp.transpose(x[..., 1:], (0, 3, 1, 2)).reshape(B * n_item, H, W)
    binf = _conv_tower_ref(bin_img, p["cb_w1"], p["cb_b1"], p["cb_w2"], p["cb_b2"])
    itemf = _conv_tower_ref(item_img, p["ci_w1"], p["ci_b1"], p["ci_w2"], p["ci_b2"])
    item_sum = itemf.reshape(B, n_item, -1).sum(axis=1)
    concat = jnp.concatenate([item_sum, binf], axis=1)
    h = jnp.maximum(concat @ p["fc1_w"].T + p["fc1_b"], 0.0)
    h = jnp.maximum(h @ p["fc2_w"].T + p["fc2_b"], 0.0)
    logits = h @ p["fc3_w"].T + p["fc3_b"]
    return jax.nn.softmax(logits, axis=1)


# ----------------------------------------------------------------------------
if __name__ == "__main__":
    key = jax.random.PRNGKey(0)
    kx, kparam = jax.random.split(key)
    B, n_item = 2, 20                          # spatial 10x10 is fixed by fc1(60)
    x = jax.random.normal(kx, (B, 10, 10, n_item + 1), jnp.float32)
    params = init_params(kparam)

    prepped = prepare_params(params)           # one-time weight folding (host side)
    out = jax.jit(policy_forward)(x, prepped)
    out = jax.block_until_ready(out)

    assert out.shape == (B, 20)
    ref = policy_reference(x, params)
    max_diff = float(jnp.max(jnp.abs(out - ref)))
    # tolerance accepts bf16 weights/activations on the MXU (f32 accumulation)
    assert max_diff < 2e-2, f"mismatch vs reference: {max_diff}"
    # exact softmax divide -> rows sum to 1 at f32 precision
    assert float(jnp.max(jnp.abs(jnp.sum(out, axis=1) - 1.0))) < 1e-4

    print("KERNEL_OK")
</pallas_src>

<mosaic_0001>
module attributes {stable_mosaic.version = 11 : i64} {
  func.func @policy_kernel(%arg0: memref<2x100xf32, #tpu.memory_space<vmem>>, %arg1: memref<40x100xf32, #tpu.memory_space<vmem>>, %arg2: memref<100x3072xbf16, #tpu.memory_space<vmem>>, %arg3: memref<384x256xbf16, #tpu.memory_space<vmem>>, %arg4: memref<64x200xbf16, #tpu.memory_space<vmem>>, %arg5: memref<200x200xbf16, #tpu.memory_space<vmem>>, %arg6: memref<200x20xbf16, #tpu.memory_space<vmem>>, %arg7: memref<8x384xf32, #tpu.memory_space<vmem>>, %arg8: memref<2x20xf32, #tpu.memory_space<vmem>>) attributes {dimension_semantics = [], scalar_prefetch = 0 : i64, scratch_operands = 0 : i64, tpu.core_type = #tpu.core_type<tc>} {
    %c0 = arith.constant 0 : index
    %c0_0 = arith.constant 0 : index
    %0 = vector.load %arg0[%c0, %c0_0] : memref<2x100xf32, #tpu.memory_space<vmem>>, vector<2x100xf32>
    %1 = arith.truncf %0 : vector<2x100xf32> to vector<2x100xbf16>
    %c0_1 = arith.constant 0 : index
    %c0_2 = arith.constant 0 : index
    %2 = vector.load %arg2[%c0_1, %c0_2] : memref<100x3072xbf16, #tpu.memory_space<vmem>>, vector<100x1536xbf16>
    %c0_3 = arith.constant 0 : index
    %c0_4 = arith.constant 0 : index
    %3 = vector.load %arg7[%c0_3, %c0_4] : memref<8x384xf32, #tpu.memory_space<vmem>>, vector<1x384xf32>
    %c0_5 = arith.constant 0 : index
    %c0_6 = arith.constant 0 : index
    %4 = vector.load %arg3[%c0_5, %c0_6] : memref<384x256xbf16, #tpu.memory_space<vmem>>, vector<384x128xbf16>
    %c5 = arith.constant 5 : index
    %c0_7 = arith.constant 0 : index
    %5 = vector.load %arg7[%c5, %c0_7] : memref<8x384xf32, #tpu.memory_space<vmem>>, vector<1x32xf32>
    %cst = arith.constant dense<0.000000e+00> : vector<2x1536xf32>
    %6 = tpu.matmul %1, %2, %cst {dimension_numbers = #tpu.dot_dimension_numbers<[1], [0], [0], [1], [0, 0, 1, 1], [], []>} : vector<2x100xbf16>, vector<100x1536xbf16>, vector<2x1536xf32> -> vector<2x1536xf32>
    %7 = vector.extract_strided_slice %6 {offsets = [0, 0], sizes = [2, 384], strides = [1, 1]} : vector<2x1536xf32> to vector<2x384xf32>
    %8 = vector.extract_strided_slice %6 {offsets = [0, 384], sizes = [2, 384], strides = [1, 1]} : vector<2x1536xf32> to vector<2x384xf32>
    %9 = arith.maximumf %7, %8 : vector<2x384xf32>
    %10 = vector.extract_strided_slice %6 {offsets = [0, 768], sizes = [2, 384], strides = [1, 1]} : vector<2x1536xf32> to vector<2x384xf32>
    %11 = vector.extract_strided_slice %6 {offsets = [0, 1152], sizes = [2, 384], strides = [1, 1]} : vector<2x1536xf32> to vector<2x384xf32>
    %12 = arith.maximumf %10, %11 : vector<2x384xf32>
    %13 = arith.maximumf %9, %12 : vector<2x384xf32>
    %14 = vector.broadcast %3 : vector<1x384xf32> to vector<2x384xf32>
    %15 = arith.addf %13, %14 : vector<2x384xf32>
    %cst_8 = arith.constant 0.000000e+00 : f32
    %16 = vector.broadcast %cst_8 : f32 to vector<2x384xf32>
    %17 = arith.maximumf %15, %16 : vector<2x384xf32>
    %18 = arith.truncf %17 : vector<2x384xf32> to vector<2x384xbf16>
    %cst_9 = arith.constant dense<0.000000e+00> : vector<2x128xf32>
    %19 = tpu.matmul %18, %4, %cst_9 {dimension_numbers = #tpu.dot_dimension_numbers<[1], [0], [0], [1], [0, 0, 1, 1], [], []>} : vector<2x384xbf16>, vector<384x128xbf16>, vector<2x128xf32> -> vector<2x128xf32>
    %20 = vector.extract_strided_slice %19 {offsets = [0, 0], sizes = [2, 32], strides = [1, 1]} : vector<2x128xf32> to vector<2x32xf32>
    %21 = vector.extract_strided_slice %19 {offsets = [0, 32], sizes = [2, 32], strides = [1, 1]} : vector<2x128xf32> to vector<2x32xf32>
    %22 = arith.maximumf %20, %21 : vector<2x32xf32>
    %23 = vector.extract_strided_slice %19 {offsets = [0, 64], sizes = [2, 32], strides = [1, 1]} : vector<2x128xf32> to vector<2x32xf32>
    %24 = vector.extract_strided_slice %19 {offsets = [0, 96], sizes = [2, 32], strides = [1, 1]} : vector<2x128xf32> to vector<2x32xf32>
    %25 = arith.maximumf %23, %24 : vector<2x32xf32>
    %26 = arith.maximumf %22, %25 : vector<2x32xf32>
    %27 = vector.broadcast %5 : vector<1x32xf32> to vector<2x32xf32>
    %28 = arith.addf %26, %27 : vector<2x32xf32>
    %cst_10 = arith.constant 0.000000e+00 : f32
    %29 = vector.broadcast %cst_10 : f32 to vector<2x32xf32>
    %30 = arith.maximumf %28, %29 : vector<2x32xf32>
    %c0_11 = arith.constant 0 : index
    %c0_12 = arith.constant 0 : index
    %31 = vector.load %arg1[%c0_11, %c0_12] : memref<40x100xf32, #tpu.memory_space<vmem>>, vector<40x100xf32>
    %32 = arith.truncf %31 : vector<40x100xf32> to vector<40x100xbf16>
    %c0_13 = arith.constant 0 : index
    %c1536 = arith.constant 1536 : index
    %33 = vector.load %arg2[%c0_13, %c1536] : memref<100x3072xbf16, #tpu.memory_space<vmem>>, vector<100x1536xbf16>
    %c1 = arith.constant 1 : index
    %c0_14 = arith.constant 0 : index
    %34 = vector.load %arg7[%c1, %c0_14] : memref<8x384xf32, #tpu.memory_space<vmem>>, vector<1x384xf32>
    %c0_15 = arith.constant 0 : index
    %c128 = arith.constant 128 : index
    %35 = vector.load %arg3[%c0_15, %c128] : memref<384x256xbf16, #tpu.memory_space<vmem>>, vector<384x128xbf16>
    %c6 = arith.constant 6 : index
    %c0_16 = arith.constant 0 : index
    %36 = vector.load %arg7[%c6, %c0_16] : memref<8x384xf32, #tpu.memory_space<vmem>>, vector<1x32xf32>
    %cst_17 = arith.constant dense<0.000000e+00> : vector<40x1536xf32>
    %37 = tpu.matmul %32, %33, %cst_17 {dimension_numbers = #tpu.dot_dimension_numbers<[1], [0], [0], [1], [0, 0, 1, 1], [], []>} : vector<40x100xbf16>, vector<100x1536xbf16>, vector<40x1536xf32> -> vector<40x1536xf32>
    %38 = vector.extract_strided_slice %37 {offsets = [0, 0], sizes = [40, 384], strides = [1, 1]} : vector<40x1536xf32> to vector<40x384xf32>
    %39 = vector.extract_strided_slice %37 {offsets = [0, 384], sizes = [40, 384], strides = [1, 1]} : vector<40x1536xf32> to vector<40x384xf32>
    %40 = arith.maximumf %38, %39 : vector<40x384xf32>
    %41 = vector.extract_strided_slice %37 {offsets = [0, 768], sizes = [40, 384], strides = [1, 1]} : vector<40x1536xf32> to vector<40x384xf32>
    %42 = vector.extract_strided_slice %37 {offsets = [0, 1152], sizes = [40, 384], strides = [1, 1]} : vector<40x1536xf32> to vector<40x384xf32>
    %43 = arith.maximumf %41, %42 : vector<40x384xf32>
    %44 = arith.maximumf %40, %43 : vector<40x384xf32>
    %45 = vector.broadcast %34 : vector<1x384xf32> to vector<40x384xf32>
    %46 = arith.addf %44, %45 : vector<40x384xf32>
    %cst_18 = arith.constant 0.000000e+00 : f32
    %47 = vector.broadcast %cst_18 : f32 to vector<40x384xf32>
    %48 = arith.maximumf %46, %47 : vector<40x384xf32>
    %49 = arith.truncf %48 : vector<40x384xf32> to vector<40x384xbf16>
    %cst_19 = arith.constant dense<0.000000e+00> : vector<40x128xf32>
    %50 = tpu.matmul %49, %35, %cst_19 {dimension_numbers = #tpu.dot_dimension_numbers<[1], [0], [0], [1], [0, 0, 1, 1], [], []>} : vector<40x384xbf16>, vector<384x128xbf16>, vector<40x128xf32> -> vector<40x128xf32>
    %51 = vector.extract_strided_slice %50 {offsets = [0, 0], sizes = [40, 32], strides = [1, 1]} : vector<40x128xf32> to vector<40x32xf32>
    %52 = vector.extract_strided_slice %50 {offsets = [0, 32], sizes = [40, 32], strides = [1, 1]} : vector<40x128xf32> to vector<40x32xf32>
    %53 = arith.maximumf %51, %52 : vector<40x32xf32>
    %54 = vector.extract_strided_slice %50 {offsets = [0, 64], sizes = [40, 32], strides = [1, 1]} : vector<40x128xf32> to vector<40x32xf32>
    %55 = vector.extract_strided_slice %50 {offsets = [0, 96], sizes = [40, 32], strides = [1, 1]} : vector<40x128xf32> to vector<40x32xf32>
    %56 = arith.maximumf %54, %55 : vector<40x32xf32>
    %57 = arith.maximumf %53, %56 : vector<40x32xf32>
    %58 = vector.broadcast %36 : vector<1x32xf32> to vector<40x32xf32>
    %59 = arith.addf %57, %58 : vector<40x32xf32>
    %cst_20 = arith.constant 0.000000e+00 : f32
    %60 = vector.broadcast %cst_20 : f32 to vector<40x32xf32>
    %61 = arith.maximumf %59, %60 : vector<40x32xf32>
    %62 = tpu.iota {dimensions = array<i32: 0>} : vector<2x40xi32>
    %63 = tpu.iota {dimensions = array<i32: 1>} : vector<2x40xi32>
    %c20_i32 = arith.constant 20 : i32
    %64 = vector.broadcast %c20_i32 : i32 to vector<2x40xi32>
    %65 = arith.muli %62, %64 : vector<2x40xi32>
    %66 = arith.cmpi sge, %63, %65 : vector<2x40xi32>
    %c1_i32 = arith.constant 1 : i32
    %67 = vector.broadcast %c1_i32 : i32 to vector<2x40xi32>
    %68 = arith.addi %62, %67 : vector<2x40xi32>
    %c20_i32_21 = arith.constant 20 : i32
    %69 = vector.broadcast %c20_i32_21 : i32 to vector<2x40xi32>
    %70 = arith.muli %68, %69 : vector<2x40xi32>
    %71 = arith.cmpi slt, %63, %70 : vector<2x40xi32>
    %72 = arith.andi %66, %71 : vector<2x40xi1>
    %cst_22 = arith.constant 1.000000e+00 : f32
    %cst_23 = arith.constant 0.000000e+00 : f32
    %73 = vector.broadcast %cst_22 : f32 to vector<2x40xf32>
    %74 = vector.broadcast %cst_23 : f32 to vector<2x40xf32>
    %75 = arith.select %72, %73, %74 : vector<2x40xi1>, vector<2x40xf32>
    %cst_24 = arith.constant dense<0.000000e+00> : vector<2x32xf32>
    %76 = tpu.matmul %75, %61, %cst_24 {dimension_numbers = #tpu.dot_dimension_numbers<[1], [0], [0], [1], [0, 0, 1, 1], [], []>} : vector<2x40xf32>, vector<40x32xf32>, vector<2x32xf32> -> vector<2x32xf32>
    %77 = tpu.concatenate %76, %30 in 1 : vector<2x32xf32>, vector<2x32xf32> -> vector<2x64xf32>
    %78 = arith.truncf %77 : vector<2x64xf32> to vector<2x64xbf16>
    %c0_25 = arith.constant 0 : index
    %c0_26 = arith.constant 0 : index
    %79 = vector.load %arg4[%c0_25, %c0_26] : memref<64x200xbf16, #tpu.memory_space<vmem>>, vector<64x200xbf16>
    %cst_27 = arith.constant dense<0.000000e+00> : vector<2x200xf32>
    %80 = tpu.matmul %78, %79, %cst_27 {dimension_numbers = #tpu.dot_dimension_numbers<[1], [0], [0], [1], [0, 0, 1, 1], [], []>} : vector<2x64xbf16>, vector<64x200xbf16>, vector<2x200xf32> -> vector<2x200xf32>
    %c2 = arith.constant 2 : index
    %c0_28 = arith.constant 0 : index
    %81 = vector.load %arg7[%c2, %c0_28] : memref<8x384xf32, #tpu.memory_space<vmem>>, vector<1x200xf32>
    %82 = vector.broadcast %81 : vector<1x200xf32> to vector<2x200xf32>
    %83 = arith.addf %80, %82 : vector<2x200xf32>
    %cst_29 = arith.constant 0.000000e+00 : f32
    %84 = vector.broadcast %cst_29 : f32 to vector<2x200xf32>
    %85 = arith.maximumf %83, %84 : vector<2x200xf32>
    %86 = arith.truncf %85 : vector<2x200xf32> to vector<2x200xbf16>
    %c0_30 = arith.constant 0 : index
    %c0_31 = arith.constant 0 : index
    %87 = vector.load %arg5[%c0_30, %c0_31] : memref<200x200xbf16, #tpu.memory_space<vmem>>, vector<200x200xbf16>
    %cst_32 = arith.constant dense<0.000000e+00> : vector<2x200xf32>
    %88 = tpu.matmul %86, %87, %cst_32 {dimension_numbers = #tpu.dot_dimension_numbers<[1], [0], [0], [1], [0, 0, 1, 1], [], []>} : vector<2x200xbf16>, vector<200x200xbf16>, vector<2x200xf32> -> vector<2x200xf32>
    %c3 = arith.constant 3 : index
    %c0_33 = arith.constant 0 : index
    %89 = vector.load %arg7[%c3, %c0_33] : memref<8x384xf32, #tpu.memory_space<vmem>>, vector<1x200xf32>
    %90 = vector.broadcast %89 : vector<1x200xf32> to vector<2x200xf32>
    %91 = arith.addf %88, %90 : vector<2x200xf32>
    %cst_34 = arith.constant 0.000000e+00 : f32
    %92 = vector.broadcast %cst_34 : f32 to vector<2x200xf32>
    %93 = arith.maximumf %91, %92 : vector<2x200xf32>
    %94 = arith.truncf %93 : vector<2x200xf32> to vector<2x200xbf16>
    %c0_35 = arith.constant 0 : index
    %c0_36 = arith.constant 0 : index
    %95 = vector.load %arg6[%c0_35, %c0_36] : memref<200x20xbf16, #tpu.memory_space<vmem>>, vector<200x20xbf16>
    %cst_37 = arith.constant dense<0.000000e+00> : vector<2x20xf32>
    %96 = tpu.matmul %94, %95, %cst_37 {dimension_numbers = #tpu.dot_dimension_numbers<[1], [0], [0], [1], [0, 0, 1, 1], [], []>} : vector<2x200xbf16>, vector<200x20xbf16>, vector<2x20xf32> -> vector<2x20xf32>
    %c4 = arith.constant 4 : index
    %c0_38 = arith.constant 0 : index
    %97 = vector.load %arg7[%c4, %c0_38] : memref<8x384xf32, #tpu.memory_space<vmem>>, vector<1x20xf32>
    %98 = vector.broadcast %97 : vector<1x20xf32> to vector<2x20xf32>
    %99 = arith.addf %96, %98 : vector<2x20xf32>
    %cst_39 = arith.constant dense<0xFF800000> : vector<2xf32>
    %100 = vector.multi_reduction <maximumf>, %99, %cst_39 [1] : vector<2x20xf32> to vector<2xf32>
    %101 = vector.shape_cast %100 : vector<2xf32> to vector<2x1xf32>
    %102 = vector.broadcast %101 : vector<2x1xf32> to vector<2x20xf32>
    %103 = arith.subf %99, %102 : vector<2x20xf32>
    %104 = math.exp %103 : vector<2x20xf32>
    %cst_40 = arith.constant dense<0.000000e+00> : vector<2xf32>
    %105 = vector.multi_reduction <add>, %104, %cst_40 [1] : vector<2x20xf32> to vector<2xf32>
    %106 = vector.shape_cast %105 : vector<2xf32> to vector<2x1xf32>
    %107 = vector.broadcast %106 : vector<2x1xf32> to vector<2x20xf32>
    %108 = arith.divf %104, %107 : vector<2x20xf32>
    %c0_41 = arith.constant 0 : index
    %c0_42 = arith.constant 0 : index
    %109 = vector.load %arg8[%c0_41, %c0_42] : memref<2x20xf32, #tpu.memory_space<vmem>>, vector<2x20xf32>
    tpu.vector_store %arg8[%c0_41, %c0_42], %108 {strides = array<i32>} : memref<2x20xf32, #tpu.memory_space<vmem>>, vector<2x20xf32>,
    return
  }
}

</mosaic_0001>

<llo_original>
// kernel: squeeze.1
$region0: #{squeeze.1}
  %s0 = inlined_call_operand.vmem [shape: f32[2,10,10,1], index: 0, kind: input, shape index: {}]
  %s1 = inlined_call_operand.vmem [shape: f32[2,100], index: 1, kind: output, shape index: {}]
  $region1: #{squeeze.1} parent=0
    #allocation0 [shape = 'u8[4096]{0}', space=vmem, size = 0x1000, scoped, tag = 'scoped mem for output reshape']
    %s2 = smov 3
    %v3 = vld [vmem:[%s0] ss:$16 sm:%s2]
    %vm4 = vcmask 80896
    %5 = vst.msk [vmem:[#allocation0] sm:$0x3] %vm4, %v3
    %s6 = scalar_lea.vmem %s0, 9
    %s7 = smov 3
    %v8 = vld [vmem:[%s6] ss:$16 sm:%s7]
    %9 = vrot.lane.b32.xlu0 %v8, 90
    %v10 = vpop.permute.xlu0 %9
    %vm11 = vcmask 818896
    %12 = vst.msk [vmem:[#allocation0] sm:$0x3] %vm11, %v10
    %s13 = scalar_lea.vmem %s0, 8
    %s14 = smov 3
    %v15 = vld [vmem:[%s13] ss:$16 sm:%s14]
    %16 = vrot.lane.b32.xlu0 %v15, 80
    %v17 = vpop.permute.xlu0 %16
    %vm18 = vcmask 736896
    %19 = vst.msk [vmem:[#allocation0] sm:$0x3] %vm18, %v17
    %s20 = scalar_lea.vmem %s0, 7
    %s21 = smov 3
    %v22 = vld [vmem:[%s20] ss:$16 sm:%s21]
    %23 = vrot.lane.b32.xlu0 %v22, 70
    %v24 = vpop.permute.xlu0 %23
    %vm25 = vcmask 654896
    %26 = vst.msk [vmem:[#allocation0] sm:$0x3] %vm25, %v24
    %s27 = scalar_lea.vmem %s0, 6
    %s28 = smov 3
    %v29 = vld [vmem:[%s27] ss:$16 sm:%s28]
    %30 = vrot.lane.b32.xlu0 %v29, 60
    %v31 = vpop.permute.xlu0 %30
    %vm32 = vcmask 572896
    %33 = vst.msk [vmem:[#allocation0] sm:$0x3] %vm32, %v31
    %s34 = scalar_lea.vmem %s0, 5
    %s35 = smov 3
    %v36 = vld [vmem:[%s34] ss:$16 sm:%s35]
    %37 = vrot.lane.b32.xlu0 %v36, 50
    %v38 = vpop.permute.xlu0 %37
    %vm39 = vcmask 490896
    %40 = vst.msk [vmem:[#allocation0] sm:$0x3] %vm39, %v38
    %s41 = scalar_lea.vmem %s0, 4
    %s42 = smov 3
    %v43 = vld [vmem:[%s41] ss:$16 sm:%s42]
    %44 = vrot.lane.b32.xlu0 %v43, 40
    %v45 = vpop.permute.xlu0 %44
    %vm46 = vcmask 408896
    %47 = vst.msk [vmem:[#allocation0] sm:$0x3] %vm46, %v45
    %s48 = scalar_lea.vmem %s0, 3
    %s49 = smov 3
    %v50 = vld [vmem:[%s48] ss:$16 sm:%s49]
    %51 = vrot.lane.b32.xlu0 %v50, 30
    %v52 = vpop.permute.xlu0 %51
    %vm53 = vcmask 326896
    %54 = vst.msk [vmem:[#allocation0] sm:$0x3] %vm53, %v52
    %s55 = scalar_lea.vmem %s0, 2
    %s56 = smov 3
    %v57 = vld [vmem:[%s55] ss:$16 sm:%s56]
    %58 = vrot.lane.b32.xlu0 %v57, 20
    %v59 = vpop.permute.xlu0 %58
    %vm60 = vcmask 244896
    %61 = vst.msk [vmem:[#allocation0] sm:$0x3] %vm60, %v59
    %s62 = scalar_lea.vmem %s0, 1
    %s63 = smov 3
    %v64 = vld [vmem:[%s62] ss:$16 sm:%s63]
    %65 = vrot.lane.b32.xlu0 %v64, 10
    %v66 = vpop.permute.xlu0 %65
    %vm67 = vcmask 162896
    %68 = vst.msk [vmem:[#allocation0] sm:$0x3] %vm67, %v66
    %s70 = sshll.u32 1, 2
    %s71 = ssub.s32 %s70, 1
    %v73 = vld [vmem:[#allocation0] sm:%s71]
    %s74 = sshll.u32 1, 2
    %s75 = ssub.s32 %s74, 1
    %76 = vst [vmem:[%s1] sm:%s75] %v73

// kernel: policy_forward.1
$region0: #{policy_forward.1}
  #allocation0 [shape = 'u32[]', space=smem, size = 0x4, offset = 0x4, fixed_abs, tag = 'smem constant byte address 0x4 - core index']
  #allocation1 [shape = 'u32[144,128]{1,0:T(1,128)}', space=vmem, size = 0x12000, scoped, tag = 'internal scratch']
  %s0 = inlined_call_operand.vmem [shape: f32[2,100], index: 0, kind: input, shape index: {}]
  %s1 = inlined_call_operand.vmem [shape: f32[40,100], index: 1, kind: input, shape index: {}]
  %s2 = inlined_call_operand.hbm [shape: bf16[100,3072], index: 2, kind: input, shape index: {}]
  %s3 = inlined_call_operand.vmem [shape: bf16[384,256], index: 3, kind: input, shape index: {}]
  %s4 = inlined_call_operand.vmem [shape: bf16[64,200], index: 4, kind: input, shape index: {}]
  %s5 = inlined_call_operand.vmem [shape: bf16[200,200], index: 5, kind: input, shape index: {}]
  %s6 = inlined_call_operand.vmem [shape: bf16[200,20], index: 6, kind: input, shape index: {}]
  %s7 = inlined_call_operand.vmem [shape: f32[8,384], index: 7, kind: input, shape index: {}]
  %s8 = inlined_call_operand.hbm [shape: f32[2,20], index: 8, kind: output, shape index: {}]
  %s9 = sld [smem:[#allocation0]]
  $region46: #{policy_forward.1} parent=0
    _
  %s11 = ssub.s32 1, %s9
  %s12 = scalar_select 0, %s11, %s9
  $region1: #{policy_forward.1} parent=0
    #allocation2 [shape = 'u8[638976]{0}', space=vmem, size = 0x9c000, scoped, tag = 'input window, operand 2, single buffered']
    #allocation3 [shape = 's32[1]{0}', space=sflag, size = 0x4, scoped, tag = 'scoped memory for policy_forward.1']
    #allocation4 [shape = 's32[1]{0}', space=sflag, size = 0x4, scoped, tag = 'scoped memory for policy_forward.1']
    #allocation5 [shape = 'u8[1024]{0}', space=vmem, size = 0x400, scoped, tag = 'output window, operand 0, single buffered']
    %13 = vsyncpa [#allocation3], 0
    %14 = vsyncpa [#allocation4], 0
    // Predicated region
    $region2: #{policy_forward.1} parent=1 // pred_check
      _
    $region3: #{policy_forward.1} parent=1 // pred_check_branch
      %16 = sbr.rel (0) target = $region5
    $region4: #{policy_forward.1} parent=1 // pred_region
      _
    $region5: #{policy_forward.1} parent=1 // pred_fallthru
      _
    // Predicated region
    $region6: #{policy_forward.1} parent=1 // pred_check
      _
    $region7: #{policy_forward.1} parent=1 // pred_check_branch
      %18 = sbr.rel (0) target = $region9
    $region8: #{policy_forward.1} parent=1 // pred_region
      _
    $region9: #{policy_forward.1} parent=1 // pred_fallthru
      _
    // Predicated region
    $region10: #{policy_forward.1} parent=1 // pred_check
      _
    $region11: #{policy_forward.1} parent=1 // pred_check_branch
      %20 = sbr.rel (0) target = $region13
    $region12: #{policy_forward.1} parent=1 // pred_region
      %s22 = ssub.s32 19968, 19968
      %23 = vsyncadd [#allocation3], %s22
      %s24 = sshll.u32 [#allocation2], 4
      %s25 = int_to_ptr.vmem [resolvable:$true] %s24
      %30 = dma.hbm_to_vmem [thread:$0]  %s2, 19968, %s25, [#allocation3], 1536, 1536, 96
    $region13: #{policy_forward.1} parent=1 // pred_fallthru
      _
    // Predicated region
    $region14: #{policy_forward.1} parent=1 // pred_check
      _
    $region15: #{policy_forward.1} parent=1 // pred_check_branch
      %32 = sbr.rel (0) target = $region17
    $region16: #{policy_forward.1} parent=1 // pred_region
      _
    $region17: #{policy_forward.1} parent=1 // pred_fallthru
      _
    // Predicated region
    $region18: #{policy_forward.1} parent=1 // pred_check
      _
    $region19: #{policy_forward.1} parent=1 // pred_check_branch
      %34 = sbr.rel (0) target = $region21
    $region20: #{policy_forward.1} parent=1 // pred_region
      _
    $region21: #{policy_forward.1} parent=1 // pred_fallthru
      _
    // Predicated region
    $region22: #{policy_forward.1} parent=1 // pred_check
      _
    $region23: #{policy_forward.1} parent=1 // pred_check_branch
      %36 = sbr.rel (0) target = $region25
    $region24: #{policy_forward.1} parent=1 // pred_region
      _
    $region25: #{policy_forward.1} parent=1 // pred_fallthru
      _
    // Predicated region
    $region26: #{policy_forward.1} parent=1 // pred_check
      _
    $region27: #{policy_forward.1} parent=1 // pred_check_branch
      %38 = sbr.rel (0) target = $region29
    $region28: #{policy_forward.1} parent=1 // pred_region
      _
    $region29: #{policy_forward.1} parent=1 // pred_fallthru
      _
    // Predicated region
    $region30: #{policy_forward.1} parent=1 // pred_check
      _
    $region31: #{policy_forward.1} parent=1 // pred_check_branch
      %40 = sbr.rel (0) target = $region33
    $region32: #{policy_forward.1} parent=1 // pred_region
      _
    $region33: #{policy_forward.1} parent=1 // pred_fallthru
      _
    // Predicated region
    $region34: #{policy_forward.1} parent=1 // pred_check
      _
    $region35: #{policy_forward.1} parent=1 // pred_check_branch
      %42 = sbr.rel (0) target = $region37
    $region36: #{policy_forward.1} parent=1 // pred_region
      %43 = dma.done [#allocation3], 19968
    $region37: #{policy_forward.1} parent=1 // pred_fallthru
      _
    %v45 = vld [vmem:[%s0] sm:$0x3]
    %v46 = vpack.c.bf16 %v45, %v45
    %v47 = vld [vmem:[#allocation2] sm:$0xff]
    %v48 = vld [vmem:[#allocation2 + $0x8] sm:$0xff]
    %v49 = vld [vmem:[#allocation2 + $0x10] sm:$0xff]
    %v50 = vld [vmem:[#allocation2 + $0x18] sm:$0xff]
    %v51 = vld [vmem:[#allocation2 + $0x20] sm:$0xff]
    %v52 = vld [vmem:[#allocation2 + $0x28] sm:$0xff]
    %v53 = vld [vmem:[#allocation2 + $0x60] sm:$0xff]
    %v54 = vld [vmem:[#allocation2 + $0x68] sm:$0xff]
    %v55 = vld [vmem:[#allocation2 + $0x70] sm:$0xff]
    %v56 = vld [vmem:[#allocation2 + $0x78] sm:$0xff]
    %v57 = vld [vmem:[#allocation2 + $0x80] sm:$0xff]
    %v58 = vld [vmem:[#allocation2 + $0x88] sm:$0xff]
    %v59 = vld [vmem:[#allocation2 + $0xc0] sm:$0xff]
    %v60 = vld [vmem:[#allocation2 + $0xc8] sm:$0xff]
    %v61 = vld [vmem:[#allocation2 + $0xd0] sm:$0xff]
    %v62 = vld [vmem:[#allocation2 + $0xd8] sm:$0xff]
    %v63 = vld [vmem:[#allocation2 + $0xe0] sm:$0xff]
    %v64 = vld [vmem:[#allocation2 + $0xe8] sm:$0xff]
    %v65 = vld [vmem:[#allocation2 + $0x120] sm:$0xff]
    %v66 = vld [vmem:[#allocation2 + $0x128] sm:$0xff]
    %v67 = vld [vmem:[#allocation2 + $0x130] sm:$0xff]
    %v68 = vld [vmem:[#allocation2 + $0x138] sm:$0xff]
    %v69 = vld [vmem:[#allocation2 + $0x140] sm:$0xff]
    %v70 = vld [vmem:[#allocation2 + $0x148] sm:$0xff]
    %v71 = vld [vmem:[#allocation2 + $0x180] sm:$0xff]
    %v72 = vld [vmem:[#allocation2 + $0x188] sm:$0xff]
    %v73 = vld [vmem:[#allocation2 + $0x190] sm:$0xff]
    %v74 = vld [vmem:[#allocation2 + $0x198] sm:$0xff]
    %v75 = vld [vmem:[#allocation2 + $0x1a0] sm:$0xff]
    %v76 = vld [vmem:[#allocation2 + $0x1a8] sm:$0xff]
    %v77 = vld [vmem:[#allocation2 + $0x1e0] sm:$0xff]
    %v78 = vld [vmem:[#allocation2 + $0x1e8] sm:$0xff]
    %v79 = vld [vmem:[#allocation2 + $0x1f0] sm:$0xff]
    %v80 = vld [vmem:[#allocation2 + $0x1f8] sm:$0xff]
    %v81 = vld [vmem:[#allocation2 + $0x200] sm:$0xff]
    %v82 = vld [vmem:[#allocation2 + $0x208] sm:$0xff]
    %v83 = vld [vmem:[#allocation2 + $0x240] sm:$0xff]
    %v84 = vld [vmem:[#allocation2 + $0x248] sm:$0xff]
    %v85 = vld [vmem:[#allocation2 + $0x250] sm:$0xff]
    %v86 = vld [vmem:[#allocation2 + $0x258] sm:$0xff]
    %v87 = vld [vmem:[#allocation2 + $0x260] sm:$0xff]
    %v88 = vld [vmem:[#allocation2 + $0x268] sm:$0xff]
    %v89 = vld [vmem:[#allocation2 + $0x2a0] sm:$0xff]
    %v90 = vld [vmem:[#allocation2 + $0x2a8] sm:$0xff]
    %v91 = vld [vmem:[#allocation2 + $0x2b0] sm:$0xff]
    %v92 = vld [vmem:[#allocation2 + $0x2b8] sm:$0xff]
    %v93 = vld [vmem:[#allocation2 + $0x2c0] sm:$0xff]
    %v94 = vld [vmem:[#allocation2 + $0x2c8] sm:$0xff]
    %v95 = vld [vmem:[#allocation2 + $0x300] sm:$0xff]
    %v96 = vld [vmem:[#allocation2 + $0x308] sm:$0xff]
    %v97 = vld [vmem:[#allocation2 + $0x310] sm:$0xff]
    %v98 = vld [vmem:[#allocation2 + $0x318] sm:$0xff]
    %v99 = vld [vmem:[#allocation2 + $0x320] sm:$0xff]
    %v100 = vld [vmem:[#allocation2 + $0x328] sm:$0xff]
    %v101 = vld [vmem:[#allocation2 + $0x360] sm:$0xff]
    %v102 = vld [vmem:[#allocation2 + $0x368] sm:$0xff]
    %v103 = vld [vmem:[#allocation2 + $0x370] sm:$0xff]
    %v104 = vld [vmem:[#allocation2 + $0x378] sm:$0xff]
    %v105 = vld [vmem:[#allocation2 + $0x380] sm:$0xff]
    %v106 = vld [vmem:[#allocation2 + $0x388] sm:$0xff]
    %v107 = vld [vmem:[#allocation2 + $0x3c0] sm:$0xff]
    %v108 = vld [vmem:[#allocation2 + $0x3c8] sm:$0xff]
    %v109 = vld [vmem:[#allocation2 + $0x3d0] sm:$0xff]
    %v110 = vld [vmem:[#allocation2 + $0x3d8] sm:$0xff]
    %v111 = vld [vmem:[#allocation2 + $0x3e0] sm:$0xff]
    %v112 = vld [vmem:[#allocation2 + $0x3e8] sm:$0xff]
    %v113 = vld [vmem:[#allocation2 + $0x420] sm:$0xff]
    %v114 = vld [vmem:[#allocation2 + $0x428] sm:$0xff]
    %v115 = vld [vmem:[#allocation2 + $0x430] sm:$0xff]
    %v116 = vld [vmem:[#allocation2 + $0x438] sm:$0xff]
    %v117 = vld [vmem:[#allocation2 + $0x440] sm:$0xff]
    %v118 = vld [vmem:[#allocation2 + $0x448] sm:$0xff]
    %v119 = vld [vmem:[#allocation2 + $0x480] sm:$0x33]
    %v120 = vld [vmem:[#allocation2 + $0x488] sm:$0x33]
    %v121 = vld [vmem:[#allocation2 + $0x490] sm:$0x33]
    %v122 = vld [vmem:[#allocation2 + $0x498] sm:$0x33]
    %v123 = vld [vmem:[#allocation2 + $0x4a0] sm:$0x33]
    %v124 = vld [vmem:[#allocation2 + $0x4a8] sm:$0x33]
    %v125 = vld [vmem:[%s7] ss:$8 sm:$0x7]
    %v126 = vld [vmem:[%s3] sm:$0xf]
    %v127 = vld [vmem:[%s3 + $0x8] sm:$0xf]
    %v128 = vld [vmem:[%s3 + $0x10] sm:$0xf]
    %v129 = vld [vmem:[%s3 + $0x18] sm:$0xf]
    %v130 = vld [vmem:[%s3 + $0x20] sm:$0xf]
    %v131 = vld [vmem:[%s3 + $0x28] sm:$0xf]
    %v132 = vld [vmem:[%s3 + $0x30] sm:$0xf]
    %v133 = vld [vmem:[%s3 + $0x38] sm:$0xf]
    %v134 = vld [vmem:[%s3 + $0x40] sm:$0xf]
    %v135 = vld [vmem:[%s3 + $0x48] sm:$0xf]
    %v136 = vld [vmem:[%s3 + $0x50] sm:$0xf]
    %v137 = vld [vmem:[%s3 + $0x58] sm:$0xf]
    %v138 = vld [vmem:[%s3 + $0x60] sm:$0xf]
    %v139 = vld [vmem:[%s3 + $0x68] sm:$0xf]
    %v140 = vld [vmem:[%s3 + $0x70] sm:$0xf]
    %v141 = vld [vmem:[%s3 + $0x78] sm:$0xf]
    %v142 = vld [vmem:[%s3 + $0x80] sm:$0xf]
    %v143 = vld [vmem:[%s3 + $0x88] sm:$0xf]
    %v144 = vld [vmem:[%s3 + $0x90] sm:$0xf]
    %v145 = vld [vmem:[%s3 + $0x98] sm:$0xf]
    %v146 = vld [vmem:[%s3 + $0xa0] sm:$0xf]
    %v147 = vld [vmem:[%s3 + $0xa8] sm:$0xf]
    %v148 = vld [vmem:[%s3 + $0xb0] sm:$0xf]
    %v149 = vld [vmem:[%s3 + $0xb8] sm:$0xf]
    %v150 = vld [vmem:[%s3 + $0xc0] sm:$0xf]
    %v151 = vld [vmem:[%s3 + $0xc8] sm:$0xf]
    %v152 = vld [vmem:[%s3 + $0xd0] sm:$0xf]
    %v153 = vld [vmem:[%s3 + $0xd8] sm:$0xf]
    %v154 = vld [vmem:[%s3 + $0xe0] sm:$0xf]
    %v155 = vld [vmem:[%s3 + $0xe8] sm:$0xf]
    %v156 = vld [vmem:[%s3 + $0xf0] sm:$0xf]
    %v157 = vld [vmem:[%s3 + $0xf8] sm:$0xf]
    %v158 = vld [vmem:[%s3 + $0x100] sm:$0xf]
    %v159 = vld [vmem:[%s3 + $0x108] sm:$0xf]
    %v160 = vld [vmem:[%s3 + $0x110] sm:$0xf]
    %v161 = vld [vmem:[%s3 + $0x118] sm:$0xf]
    %v162 = vld [vmem:[%s3 + $0x120] sm:$0xf]
    %v163 = vld [vmem:[%s3 + $0x128] sm:$0xf]
    %v164 = vld [vmem:[%s3 + $0x130] sm:$0xf]
    %v165 = vld [vmem:[%s3 + $0x138] sm:$0xf]
    %v166 = vld [vmem:[%s3 + $0x140] sm:$0xf]
    %v167 = vld [vmem:[%s3 + $0x148] sm:$0xf]
    %v168 = vld [vmem:[%s3 + $0x150] sm:$0xf]
    %v169 = vld [vmem:[%s3 + $0x158] sm:$0xf]
    %v170 = vld [vmem:[%s3 + $0x160] sm:$0xf]
    %v171 = vld [vmem:[%s3 + $0x168] sm:$0xf]
    %v172 = vld [vmem:[%s3 + $0x170] sm:$0xf]
    %v173 = vld [vmem:[%s3 + $0x178] sm:$0xf]
    %v174 = vld [vmem:[%s7 + $0x5] ss:$0 sm:$0xff]
    %v253 = vunpack.c.l.b16 %v47
    %v254 = vunpack.c.h.b16 %v47
    %v255 = vunpack.c.l.b16 %v48
    %v256 = vunpack.c.h.b16 %v48
    %v257 = vunpack.c.l.b16 %v49
    %v258 = vunpack.c.h.b16 %v49
    %v259 = vunpack.c.l.b16 %v50
    %v260 = vunpack.c.h.b16 %v50
    %v261 = vunpack.c.l.b16 %v51
    %v262 = vunpack.c.h.b16 %v51
    %v263 = vunpack.c.l.b16 %v52
    %v264 = vunpack.c.h.b16 %v52
    %v265 = vunpack.c.l.b16 %v53
    %v266 = vunpack.c.h.b16 %v53
    %v267 = vunpack.c.l.b16 %v54
    %v268 = vunpack.c.h.b16 %v54
    %v269 = vunpack.c.l.b16 %v55
    %v270 = vunpack.c.h.b16 %v55
    %v271 = vunpack.c.l.b16 %v56
    %v272 = vunpack.c.h.b16 %v56
    %v273 = vunpack.c.l.b16 %v57
    %v274 = vunpack.c.h.b16 %v57
    %v275 = vunpack.c.l.b16 %v58
    %v276 = vunpack.c.h.b16 %v58
    %v277 = vunpack.c.l.b16 %v59
    %v278 = vunpack.c.h.b16 %v59
    %v279 = vunpack.c.l.b16 %v60
    %v280 = vunpack.c.h.b16 %v60
    %v281 = vunpack.c.l.b16 %v61
    %v282 = vunpack.c.h.b16 %v61
    %v283 = vunpack.c.l.b16 %v62
    %v284 = vunpack.c.h.b16 %v62
    %v285 = vunpack.c.l.b16 %v63
    %v286 = vunpack.c.h.b16 %v63
    %v287 = vunpack.c.l.b16 %v64
    %v288 = vunpack.c.h.b16 %v64
    %v289 = vunpack.c.l.b16 %v65
    %v290 = vunpack.c.h.b16 %v65
    %v291 = vunpack.c.l.b16 %v66
    %v292 = vunpack.c.h.b16 %v66
    %v293 = vunpack.c.l.b16 %v67
    %v294 = vunpack.c.h.b16 %v67
    %v295 = vunpack.c.l.b16 %v68
    %v296 = vunpack.c.h.b16 %v68
    %v297 = vunpack.c.l.b16 %v69
    %v298 = vunpack.c.h.b16 %v69
    %v299 = vunpack.c.l.b16 %v70
    %v300 = vunpack.c.h.b16 %v70
    %v301 = vunpack.c.l.b16 %v71
    %v302 = vunpack.c.h.b16 %v71
    %v303 = vunpack.c.l.b16 %v72
    %v304 = vunpack.c.h.b16 %v72
    %v305 = vunpack.c.l.b16 %v73
    %v306 = vunpack.c.h.b16 %v73
    %v307 = vunpack.c.l.b16 %v74
    %v308 = vunpack.c.h.b16 %v74
    %v309 = vunpack.c.l.b16 %v75
    %v310 = vunpack.c.h.b16 %v75
    %v311 = vunpack.c.l.b16 %v76
    %v312 = vunpack.c.h.b16 %v76
    %v313 = vunpack.c.l.b16 %v77
    %v314 = vunpack.c.h.b16 %v77
    %v315 = vunpack.c.l.b16 %v78
    %v316 = vunpack.c.h.b16 %v78
    %v317 = vunpack.c.l.b16 %v79
    %v318 = vunpack.c.h.b16 %v79
    %v319 = vunpack.c.l.b16 %v80
    %v320 = vunpack.c.h.b16 %v80
    %v321 = vunpack.c.l.b16 %v81
    %v322 = vunpack.c.h.b16 %v81
    %v323 = vunpack.c.l.b16 %v82
    %v324 = vunpack.c.h.b16 %v82
    %v325 = vunpack.c.l.b16 %v83
    %v326 = vunpack.c.h.b16 %v83
    %v327 = vunpack.c.l.b16 %v84
    %v328 = vunpack.c.h.b16 %v84
    %v329 = vunpack.c.l.b16 %v85
    %v330 = vunpack.c.h.b16 %v85
    %v331 = vunpack.c.l.b16 %v86
    %v332 = vunpack.c.h.b16 %v86
    %v333 = vunpack.c.l.b16 %v87
    %v334 = vunpack.c.h.b16 %v87
    %v335 = vunpack.c.l.b16 %v88
    %v336 = vunpack.c.h.b16 %v88
    %v337 = vunpack.c.l.b16 %v89
    %v338 = vunpack.c.h.b16 %v89
    %v339 = vunpack.c.l.b16 %v90
    %v340 = vunpack.c.h.b16 %v90
    %v341 = vunpack.c.l.b16 %v91
    %v342 = vunpack.c.h.b16 %v91
    %v343 = vunpack.c.l.b16 %v92
    %v344 = vunpack.c.h.b16 %v92
    %v345 = vunpack.c.l.b16 %v93
    %v346 = vunpack.c.h.b16 %v93
    %v347 = vunpack.c.l.b16 %v94
    %v348 = vunpack.c.h.b16 %v94
    %v349 = vunpack.c.l.b16 %v95
    %v350 = vunpack.c.h.b16 %v95
    %v351 = vunpack.c.l.b16 %v96
    %v352 = vunpack.c.h.b16 %v96
    %v353 = vunpack.c.l.b16 %v97
    %v354 = vunpack.c.h.b16 %v97
    %v355 = vunpack.c.l.b16 %v98
    %v356 = vunpack.c.h.b16 %v98
    %v357 = vunpack.c.l.b16 %v99
    %v358 = vunpack.c.h.b16 %v99
    %v359 = vunpack.c.l.b16 %v100
    %v360 = vunpack.c.h.b16 %v100
    %v361 = vunpack.c.l.b16 %v101
    %v362 = vunpack.c.h.b16 %v101
    %v363 = vunpack.c.l.b16 %v102
    %v364 = vunpack.c.h.b16 %v102
    %v365 = vunpack.c.l.b16 %v103
    %v366 = vunpack.c.h.b16 %v103
    %v367 = vunpack.c.l.b16 %v104
    %v368 = vunpack.c.h.b16 %v104
    %v369 = vunpack.c.l.b16 %v105
    %v370 = vunpack.c.h.b16 %v105
    %v371 = vunpack.c.l.b16 %v106
    %v372 = vunpack.c.h.b16 %v106
    %v373 = vunpack.c.l.b16 %v107
    %v374 = vunpack.c.h.b16 %v107
    %v375 = vunpack.c.l.b16 %v108
    %v376 = vunpack.c.h.b16 %v108
    %v377 = vunpack.c.l.b16 %v109
    %v378 = vunpack.c.h.b16 %v109
    %v379 = vunpack.c.l.b16 %v110
    %v380 = vunpack.c.h.b16 %v110
    %v381 = vunpack.c.l.b16 %v111
    %v382 = vunpack.c.h.b16 %v111
    %v383 = vunpack.c.l.b16 %v112
    %v384 = vunpack.c.h.b16 %v112
    %v385 = vunpack.c.l.b16 %v113
    %v386 = vunpack.c.h.b16 %v113
    %v387 = vunpack.c.l.b16 %v114
    %v388 = vunpack.c.h.b16 %v114
    %v389 = vunpack.c.l.b16 %v115
    %v390 = vunpack.c.h.b16 %v115
    %v391 = vunpack.c.l.b16 %v116
    %v392 = vunpack.c.h.b16 %v116
    %v393 = vunpack.c.l.b16 %v117
    %v394 = vunpack.c.h.b16 %v117
    %v395 = vunpack.c.l.b16 %v118
    %v396 = vunpack.c.h.b16 %v118
    %v397 = vunpack.c.l.b16 %v119
    %v398 = vunpack.c.h.b16 %v119
    %v399 = vunpack.c.l.b16 %v120
    %v400 = vunpack.c.h.b16 %v120
    %v401 = vunpack.c.l.b16 %v121
    %v402 = vunpack.c.h.b16 %v121
    %v403 = vunpack.c.l.b16 %v122
    %v404 = vunpack.c.h.b16 %v122
    %v405 = vunpack.c.l.b16 %v123
    %v406 = vunpack.c.h.b16 %v123
    %v407 = vunpack.c.l.b16 %v124
    %v408 = vunpack.c.h.b16 %v124
    %v409 = vpack.c.b16 %v265, %v253
    %v410 = vpack.c.b16 %v266, %v254
    %v411 = vpack.c.b16 %v267, %v255
    %v412 = vpack.c.b16 %v268, %v256
    %v413 = vpack.c.b16 %v269, %v257
    %v414 = vpack.c.b16 %v270, %v258
    %v415 = vpack.c.b16 %v271, %v259
    %v416 = vpack.c.b16 %v272, %v260
    %v417 = vpack.c.b16 %v273, %v261
    %v418 = vpack.c.b16 %v274, %v262
    %v419 = vpack.c.b16 %v275, %v263
    %v420 = vpack.c.b16 %v276, %v264
    %v421 = vpack.c.b16 %v289, %v277
    %v422 = vpack.c.b16 %v290, %v278
    %v423 = vpack.c.b16 %v291, %v279
    %v424 = vpack.c.b16 %v292, %v280
    %v425 = vpack.c.b16 %v293, %v281
    %v426 = vpack.c.b16 %v294, %v282
    %v427 = vpack.c.b16 %v295, %v283
    %v428 = vpack.c.b16 %v296, %v284
    %v429 = vpack.c.b16 %v297, %v285
    %v430 = vpack.c.b16 %v298, %v286
    %v431 = vpack.c.b16 %v299, %v287
    %v432 = vpack.c.b16 %v300, %v288
    %v433 = vpack.c.b16 %v313, %v301
    %v434 = vpack.c.b16 %v314, %v302
    %v435 = vpack.c.b16 %v315, %v303
    %v436 = vpack.c.b16 %v316, %v304
    %v437 = vpack.c.b16 %v317, %v305
    %v438 = vpack.c.b16 %v318, %v306
    %v439 = vpack.c.b16 %v319, %v307
    %v440 = vpack.c.b16 %v320, %v308
    %v441 = vpack.c.b16 %v321, %v309
    %v442 = vpack.c.b16 %v322, %v310
    %v443 = vpack.c.b16 %v323, %v311
    %v444 = vpack.c.b16 %v324, %v312
    %v445 = vpack.c.b16 %v337, %v325
    %v446 = vpack.c.b16 %v338, %v326
    %v447 = vpack.c.b16 %v339, %v327
    %v448 = vpack.c.b16 %v340, %v328
    %v449 = vpack.c.b16 %v341, %v329
    %v450 = vpack.c.b16 %v342, %v330
    %v451 = vpack.c.b16 %v343, %v331
    %v452 = vpack.c.b16 %v344, %v332
    %v453 = vpack.c.b16 %v345, %v333
    %v454 = vpack.c.b16 %v346, %v334
    %v455 = vpack.c.b16 %v347, %v335
    %v456 = vpack.c.b16 %v348, %v336
    %v457 = vpack.c.b16 %v361, %v349
    %v458 = vpack.c.b16 %v362, %v350
    %v459 = vpack.c.b16 %v363, %v351
    %v460 = vpack.c.b16 %v364, %v352
    %v461 = vpack.c.b16 %v365, %v353
    %v462 = vpack.c.b16 %v366, %v354
    %v463 = vpack.c.b16 %v367, %v355
    %v464 = vpack.c.b16 %v368, %v356
    %v465 = vpack.c.b16 %v369, %v357
    %v466 = vpack.c.b16 %v370, %v358
    %v467 = vpack.c.b16 %v371, %v359
    %v468 = vpack.c.b16 %v372, %v360
    %v469 = vpack.c.b16 %v385, %v373
    %v470 = vpack.c.b16 %v386, %v374
    %v471 = vpack.c.b16 %v387, %v375
    %v472 = vpack.c.b16 %v388, %v376
    %v473 = vpack.c.b16 %v389, %v377
    %v474 = vpack.c.b16 %v390, %v378
    %v475 = vpack.c.b16 %v391, %v379
    %v476 = vpack.c.b16 %v392, %v380
    %v477 = vpack.c.b16 %v393, %v381
    %v478 = vpack.c.b16 %v394, %v382
    %v479 = vpack.c.b16 %v395, %v383
    %v480 = vpack.c.b16 %v396, %v384
    %v481 = vpack.c.b16 %v397, %v397
    %v482 = vpack.c.b16 %v398, %v398
    %v483 = vpack.c.b16 %v399, %v399
    %v484 = vpack.c.b16 %v400, %v400
    %v485 = vpack.c.b16 %v401, %v401
    %v486 = vpack.c.b16 %v402, %v402
    %v487 = vpack.c.b16 %v403, %v403
    %v488 = vpack.c.b16 %v404, %v404
    %v489 = vpack.c.b16 %v405, %v405
    %v490 = vpack.c.b16 %v406, %v406
    %v491 = vpack.c.b16 %v407, %v407
    %v492 = vpack.c.b16 %v408, %v408
    %vm565 = vcmask 818176
    %v567 = vsel %vm565, %v46, 0
    %vm569 = vcmask 1041408
    %v571 = vsel %vm569, %v481, 0
    %v574 = vsel %vm569, %v482, 0
    %v577 = vsel %vm569, %v483, 0
    %v580 = vsel %vm569, %v484, 0
    %v583 = vsel %vm569, %v485, 0
    %v586 = vsel %vm569, %v486, 0
    %v589 = vsel %vm569, %v487, 0
    %v592 = vsel %vm569, %v488, 0
    %v595 = vsel %vm569, %v489, 0
    %v598 = vsel %vm569, %v490, 0
    %v601 = vsel %vm569, %v491, 0
    %v604 = vsel %vm569, %v492, 0
    %606 = vmatprep.subr.bf16.mxu0 0
    %607 = vmatpush1.bf16.msra.mxu0 0
    %608 = vmatprep.subr.bf16.mxu0 %v574
    %609 = vmatpush1.bf16.msra.mxu0 %v571
    %610 = vmatprep.subr.bf16.mxu0 %v470
    %611 = vmatpush1.bf16.msra.mxu0 %v469
    %612 = vmatprep.subr.bf16.mxu0 %v458
    %613 = vmatpush1.bf16.msra.mxu0 %v457
    %614 = vmatprep.subr.bf16.mxu0 %v446
    %615 = vmatpush1.bf16.msra.mxu0 %v445
    %616 = vmatprep.subr.bf16.mxu0 %v434
    %617 = vmatpush1.bf16.msra.mxu0 %v433
    %618 = vmatprep.subr.bf16.mxu0 %v422
    %619 = vmatpush1.bf16.msra.mxu0 %v421
    %620 = vmatprep.subr.bf16.mxu0 %v410
    %621 = vmatpush1.bf16.msra.mxu0 %v409
    %622 = vmatprep.subr.bf16.mxu0 0
    %623 = vmatpush2.bf16.msra.mxu0 0
    %624 = vmatprep.subr.bf16.mxu0 0
    %625 = vmatpush2.bf16.msra.mxu0 0
    %626 = vmatprep.subr.bf16.mxu0 0
    %627 = vmatpush2.bf16.msra.mxu0 0
    %628 = vmatprep.subr.bf16.mxu0 0
    %629 = vmatpush2.bf16.msra.mxu0 0
    %630 = vmatprep.subr.bf16.mxu0 0
    %631 = vmatpush2.bf16.msra.mxu0 0
    %632 = vmatprep.subr.bf16.mxu0 0
    %633 = vmatpush2.bf16.msra.mxu0 0
    %634 = vmatprep.subr.bf16.mxu0 0
    %635 = vmatpush2.bf16.msra.mxu0 0
    %636 = vmatprep.subr.bf16.mxu0 0
    %637 = vmatpush2.bf16.msra.mxu0 0
    %638 = vmatprep.mubr.bf16.mxu0 0
    %639 = vmatmul.mubr.bf16.gmra.mxu0 %v567
    %v640 = vpop.f32.mrf.mxu0
    %v641 = vadd.f32 0.0, %v640
    %v642 = vpop.f32.mrf.mxu0
    %v643 = vadd.f32 0.0, %v642
    %v644 = vpop.f32.mrf.mxu0
    %v645 = vpop.f32.mrf.mxu0
    %646 = vdwg.mxu0
    %647 = vmatprep.subr.bf16.mxu0 0
    %648 = vmatpush1.bf16.msra.mxu0 0
    %649 = vmatprep.subr.bf16.mxu0 %v580
    %650 = vmatpush1.bf16.msra.mxu0 %v577
    %651 = vmatprep.subr.bf16.mxu0 %v472
    %652 = vmatpush1.bf16.msra.mxu0 %v471
    %653 = vmatprep.subr.bf16.mxu0 %v460
    %654 = vmatpush1.bf16.msra.mxu0 %v459
    %655 = vmatprep.subr.bf16.mxu0 %v448
    %656 = vmatpush1.bf16.msra.mxu0 %v447
    %657 = vmatprep.subr.bf16.mxu0 %v436
    %658 = vmatpush1.bf16.msra.mxu0 %v435
    %659 = vmatprep.subr.bf16.mxu0 %v424
    %660 = vmatpush1.bf16.msra.mxu0 %v423
    %661 = vmatprep.subr.bf16.mxu0 %v412
    %662 = vmatpush1.bf16.msra.mxu0 %v411
    %663 = vmatprep.subr.bf16.mxu0 0
    %664 = vmatpush2.bf16.msra.mxu0 0
    %665 = vmatprep.subr.bf16.mxu0 0
    %666 = vmatpush2.bf16.msra.mxu0 0
    %667 = vmatprep.subr.bf16.mxu0 0
    %668 = vmatpush2.bf16.msra.mxu0 0
    %669 = vmatprep.subr.bf16.mxu0 0
    %670 = vmatpush2.bf16.msra.mxu0 0
    %671 = vmatprep.subr.bf16.mxu0 0
    %672 = vmatpush2.bf16.msra.mxu0 0
    %673 = vmatprep.subr.bf16.mxu0 0
    %674 = vmatpush2.bf16.msra.mxu0 0
    %675 = vmatprep.subr.bf16.mxu0 0
    %676 = vmatpush2.bf16.msra.mxu0 0
    %677 = vmatprep.subr.bf16.mxu0 0
    %678 = vmatpush2.bf16.msra.mxu0 0
    %679 = vmatprep.mubr.bf16.mxu0 0
    %680 = vmatmul.mubr.bf16.gmra.mxu0 %v567
    %v681 = vpop.f32.mrf.mxu0
    %v682 = vadd.f32 0.0, %v681
    %v683 = vpop.f32.mrf.mxu0
    %v684 = vadd.f32 0.0, %v683
    %v685 = vpop.f32.mrf.mxu0
    %v686 = vpop.f32.mrf.mxu0
    %687 = vdwg.mxu0
    %688 = vmatprep.subr.bf16.mxu0 0
    %689 = vmatpush1.bf16.msra.mxu0 0
    %690 = vmatprep.subr.bf16.mxu0 %v586
    %691 = vmatpush1.bf16.msra.mxu0 %v583
    %692 = vmatprep.subr.bf16.mxu0 %v474
    %693 = vmatpush1.bf16.msra.mxu0 %v473
    %694 = vmatprep.subr.bf16.mxu0 %v462
    %695 = vmatpush1.bf16.msra.mxu0 %v461
    %696 = vmatprep.subr.bf16.mxu0 %v450
    %697 = vmatpush1.bf16.msra.mxu0 %v449
    %698 = vmatprep.subr.bf16.mxu0 %v438
    %699 = vmatpush1.bf16.msra.mxu0 %v437
    %700 = vmatprep.subr.bf16.mxu0 %v426
    %701 = vmatpush1.bf16.msra.mxu0 %v425
    %702 = vmatprep.subr.bf16.mxu0 %v414
    %703 = vmatpush1.bf16.msra.mxu0 %v413
    %704 = vmatprep.subr.bf16.mxu0 0
    %705 = vmatpush2.bf16.msra.mxu0 0
    %706 = vmatprep.subr.bf16.mxu0 0
    %707 = vmatpush2.bf16.msra.mxu0 0
    %708 = vmatprep.subr.bf16.mxu0 0
    %709 = vmatpush2.bf16.msra.mxu0 0
    %710 = vmatprep.subr.bf16.mxu0 0
    %711 = vmatpush2.bf16.msra.mxu0 0
    %712 = vmatprep.subr.bf16.mxu0 0
    %713 = vmatpush2.bf16.msra.mxu0 0
    %714 = vmatprep.subr.bf16.mxu0 0
    %715 = vmatpush2.bf16.msra.mxu0 0
    %716 = vmatprep.subr.bf16.mxu0 0
    %717 = vmatpush2.bf16.msra.mxu0 0
    %718 = vmatprep.subr.bf16.mxu0 0
    %719 = vmatpush2.bf16.msra.mxu0 0
    %720 = vmatprep.mubr.bf16.mxu0 0
    %721 = vmatmul.mubr.bf16.gmra.mxu0 %v567
    %v722 = vpop.f32.mrf.mxu0
    %v723 = vadd.f32 0.0, %v722
    %v724 = vpop.f32.mrf.mxu0
    %v725 = vadd.f32 0.0, %v724
    %v726 = vpop.f32.mrf.mxu0
    %v727 = vpop.f32.mrf.mxu0
    %728 = vdwg.mxu0
    %729 = vmatprep.subr.bf16.mxu0 0
    %730 = vmatpush1.bf16.msra.mxu0 0
    %731 = vmatprep.subr.bf16.mxu0 %v592
    %732 = vmatpush1.bf16.msra.mxu0 %v589
    %733 = vmatprep.subr.bf16.mxu0 %v476
    %734 = vmatpush1.bf16.msra.mxu0 %v475
    %735 = vmatprep.subr.bf16.mxu0 %v464
    %736 = vmatpush1.bf16.msra.mxu0 %v463
    %737 = vmatprep.subr.bf16.mxu0 %v452
    %738 = vmatpush1.bf16.msra.mxu0 %v451
    %739 = vmatprep.subr.bf16.mxu0 %v440
    %740 = vmatpush1.bf16.msra.mxu0 %v439
    %741 = vmatprep.subr.bf16.mxu0 %v428
    %742 = vmatpush1.bf16.msra.mxu0 %v427
    %743 = vmatprep.subr.bf16.mxu0 %v416
    %744 = vmatpush1.bf16.msra.mxu0 %v415
    %745 = vmatprep.subr.bf16.mxu0 0
    %746 = vmatpush2.bf16.msra.mxu0 0
    %747 = vmatprep.subr.bf16.mxu0 0
    %748 = vmatpush2.bf16.msra.mxu0 0
    %749 = vmatprep.subr.bf16.mxu0 0
    %750 = vmatpush2.bf16.msra.mxu0 0
    %751 = vmatprep.subr.bf16.mxu0 0
    %752 = vmatpush2.bf16.msra.mxu0 0
    %753 = vmatprep.subr.bf16.mxu0 0
    %754 = vmatpush2.bf16.msra.mxu0 0
    %755 = vmatprep.subr.bf16.mxu0 0
    %756 = vmatpush2.bf16.msra.mxu0 0
    %757 = vmatprep.subr.bf16.mxu0 0
    %758 = vmatpush2.bf16.msra.mxu0 0
    %759 = vmatprep.subr.bf16.mxu0 0
    %760 = vmatpush2.bf16.msra.mxu0 0
    %761 = vmatprep.mubr.bf16.mxu0 0
    %762 = vmatmul.mubr.bf16.gmra.mxu0 %v567
    %v763 = vpop.f32.mrf.mxu0
    %v764 = vadd.f32 0.0, %v763
    %v765 = vpop.f32.mrf.mxu0
    %v766 = vadd.f32 0.0, %v765
    %v767 = vpop.f32.mrf.mxu0
    %v768 = vpop.f32.mrf.mxu0
    %769 = vdwg.mxu0
    %770 = vmatprep.subr.bf16.mxu0 0
    %771 = vmatpush1.bf16.msra.mxu0 0
    %772 = vmatprep.subr.bf16.mxu0 %v598
    %773 = vmatpush1.bf16.msra.mxu0 %v595
    %774 = vmatprep.subr.bf16.mxu0 %v478
    %775 = vmatpush1.bf16.msra.mxu0 %v477
    %776 = vmatprep.subr.bf16.mxu0 %v466
    %777 = vmatpush1.bf16.msra.mxu0 %v465
    %778 = vmatprep.subr.bf16.mxu0 %v454
    %779 = vmatpush1.bf16.msra.mxu0 %v453
    %780 = vmatprep.subr.bf16.mxu0 %v442
    %781 = vmatpush1.bf16.msra.mxu0 %v441
    %782 = vmatprep.subr.bf16.mxu0 %v430
    %783 = vmatpush1.bf16.msra.mxu0 %v429
    %784 = vmatprep.subr.bf16.mxu0 %v418
    %785 = vmatpush1.bf16.msra.mxu0 %v417
    %786 = vmatprep.subr.bf16.mxu0 0
    %787 = vmatpush2.bf16.msra.mxu0 0
    %788 = vmatprep.subr.bf16.mxu0 0
    %789 = vmatpush2.bf16.msra.mxu0 0
    %790 = vmatprep.subr.bf16.mxu0 0
    %791 = vmatpush2.bf16.msra.mxu0 0
    %792 = vmatprep.subr.bf16.mxu0 0
    %793 = vmatpush2.bf16.msra.mxu0 0
    %794 = vmatprep.subr.bf16.mxu0 0
    %795 = vmatpush2.bf16.msra.mxu0 0
    %796 = vmatprep.subr.bf16.mxu0 0
    %797 = vmatpush2.bf16.msra.mxu0 0
    %798 = vmatprep.subr.bf16.mxu0 0
    %799 = vmatpush2.bf16.msra.mxu0 0
    %800 = vmatprep.subr.bf16.mxu0 0
    %801 = vmatpush2.bf16.msra.mxu0 0
    %802 = vmatprep.mubr.bf16.mxu0 0
    %803 = vmatmul.mubr.bf16.gmra.mxu0 %v567
    %v804 = vpop.f32.mrf.mxu0
    %v805 = vadd.f32 0.0, %v804
    %v806 = vpop.f32.mrf.mxu0
    %v807 = vadd.f32 0.0, %v806
    %v808 = vpop.f32.mrf.mxu0
    %v809 = vpop.f32.mrf.mxu0
    %810 = vdwg.mxu0
    %811 = vmatprep.subr.bf16.mxu0 0
    %812 = vmatpush1.bf16.msra.mxu0 0
    %813 = vmatprep.subr.bf16.mxu0 %v604
    %814 = vmatpush1.bf16.msra.mxu0 %v601
    %815 = vmatprep.subr.bf16.mxu0 %v480
    %816 = vmatpush1.bf16.msra.mxu0 %v479
    %817 = vmatprep.subr.bf16.mxu0 %v468
    %818 = vmatpush1.bf16.msra.mxu0 %v467
    %819 = vmatprep.subr.bf16.mxu0 %v456
    %820 = vmatpush1.bf16.msra.mxu0 %v455
    %821 = vmatprep.subr.bf16.mxu0 %v444
    %822 = vmatpush1.bf16.msra.mxu0 %v443
    %823 = vmatprep.subr.bf16.mxu0 %v432
    %824 = vmatpush1.bf16.msra.mxu0 %v431
    %825 = vmatprep.subr.bf16.mxu0 %v420
    %826 = vmatpush1.bf16.msra.mxu0 %v419
    %827 = vmatprep.subr.bf16.mxu0 0
    %828 = vmatpush2.bf16.msra.mxu0 0
    %829 = vmatprep.subr.bf16.mxu0 0
    %830 = vmatpush2.bf16.msra.mxu0 0
    %831 = vmatprep.subr.bf16.mxu0 0
    %832 = vmatpush2.bf16.msra.mxu0 0
    %833 = vmatprep.subr.bf16.mxu0 0
    %834 = vmatpush2.bf16.msra.mxu0 0
    %835 = vmatprep.subr.bf16.mxu0 0
    %836 = vmatpush2.bf16.msra.mxu0 0
    %837 = vmatprep.subr.bf16.mxu0 0
    %838 = vmatpush2.bf16.msra.mxu0 0
    %839 = vmatprep.subr.bf16.mxu0 0
    %840 = vmatpush2.bf16.msra.mxu0 0
    %841 = vmatprep.subr.bf16.mxu0 0
    %842 = vmatpush2.bf16.msra.mxu0 0
    %843 = vmatprep.mubr.bf16.mxu0 0
    %844 = vmatmul.mubr.bf16.gmra.mxu0 %v567
    %v845 = vpop.f32.mrf.mxu0
    %v846 = vadd.f32 0.0, %v845
    %v847 = vpop.f32.mrf.mxu0
    %v848 = vadd.f32 0.0, %v847
    %v849 = vpop.f32.mrf.mxu0
    %v850 = vpop.f32.mrf.mxu0
    %851 = vdwg.mxu0
    %v852 = vmax.f32 %v641, %v684
    %v853 = vmax.f32 %v643, %v723
    %v854 = vmax.f32 %v682, %v725
    %v855 = vmax.f32 %v764, %v807
    %v856 = vmax.f32 %v766, %v846
    %v857 = vmax.f32 %v805, %v848
    %v858 = vmax.f32 %v852, %v855
    %v859 = vmax.f32 %v853, %v856
    %v860 = vmax.f32 %v854, %v857
    %v862 = vlaneseq
    %v863 = vshrl.u32 %v862, 7
    %v864 = vsub.s32 0, %v863
    %v865 = vrot.slane %v125, %v864
    %v866 = vlaneseq
    %v867 = vshrl.u32 %v866, 7
    %v868 = vsub.s32 1, %v867
    %v869 = vrot.slane %v125, %v868
    %v870 = vlaneseq
    %v871 = vshrl.u32 %v870, 7
    %v872 = vsub.s32 2, %v871
    %v873 = vrot.slane %v125, %v872
    %v877 = vadd.f32 %v858, %v865
    %v878 = vadd.f32 %v859, %v869
    %v879 = vadd.f32 %v860, %v873
    %v880 = vmax.f32 %v877, 0.0
    %v881 = vmax.f32 %v878, 0.0
    %v882 = vmax.f32 %v879, 0.0
    %v883 = vpack.c.bf16 %v880, %v880
    %v884 = vpack.c.bf16 %v881, %v881
    %v885 = vpack.c.bf16 %v882, %v882
    %v934 = vunpack.c.l.b16 %v126
    %v935 = vunpack.c.l.b16 %v127
    %v936 = vunpack.c.l.b16 %v128
    %v937 = vunpack.c.l.b16 %v129
    %v938 = vunpack.c.l.b16 %v130
    %v939 = vunpack.c.l.b16 %v131
    %v940 = vunpack.c.l.b16 %v132
    %v941 = vunpack.c.l.b16 %v133
    %v942 = vunpack.c.l.b16 %v134
    %v943 = vunpack.c.l.b16 %v135
    %v944 = vunpack.c.l.b16 %v136
    %v945 = vunpack.c.l.b16 %v137
    %v946 = vunpack.c.l.b16 %v138
    %v947 = vunpack.c.l.b16 %v139
    %v948 = vunpack.c.l.b16 %v140
    %v949 = vunpack.c.l.b16 %v141
    %v950 = vunpack.c.l.b16 %v142
    %v951 = vunpack.c.l.b16 %v143
    %v952 = vunpack.c.l.b16 %v144
    %v953 = vunpack.c.l.b16 %v145
    %v954 = vunpack.c.l.b16 %v146
    %v955 = vunpack.c.l.b16 %v147
    %v956 = vunpack.c.l.b16 %v148
    %v957 = vunpack.c.l.b16 %v149
    %v958 = vunpack.c.l.b16 %v150
    %v959 = vunpack.c.l.b16 %v151
    %v960 = vunpack.c.l.b16 %v152
    %v961 = vunpack.c.l.b16 %v153
    %v962 = vunpack.c.l.b16 %v154
    %v963 = vunpack.c.l.b16 %v155
    %v964 = vunpack.c.l.b16 %v156
    %v965 = vunpack.c.l.b16 %v157
    %v966 = vunpack.c.l.b16 %v158
    %v967 = vunpack.c.l.b16 %v159
    %v968 = vunpack.c.l.b16 %v160
    %v969 = vunpack.c.l.b16 %v161
    %v970 = vunpack.c.l.b16 %v162
    %v971 = vunpack.c.l.b16 %v163
    %v972 = vunpack.c.l.b16 %v164
    %v973 = vunpack.c.l.b16 %v165
    %v974 = vunpack.c.l.b16 %v166
    %v975 = vunpack.c.l.b16 %v167
    %v976 = vunpack.c.l.b16 %v168
    %v977 = vunpack.c.l.b16 %v169
    %v978 = vunpack.c.l.b16 %v170
    %v979 = vunpack.c.l.b16 %v171
    %v980 = vunpack.c.l.b16 %v172
    %v981 = vunpack.c.l.b16 %v173
    %v982 = vpack.c.b16 %v935, %v934
    %v983 = vpack.c.b16 %v937, %v936
    %v984 = vpack.c.b16 %v939, %v938
    %v985 = vpack.c.b16 %v941, %v940
    %v986 = vpack.c.b16 %v943, %v942
    %v987 = vpack.c.b16 %v945, %v944
    %v988 = vpack.c.b16 %v947, %v946
    %v989 = vpack.c.b16 %v949, %v948
    %v990 = vpack.c.b16 %v951, %v950
    %v991 = vpack.c.b16 %v953, %v952
    %v992 = vpack.c.b16 %v955, %v954
    %v993 = vpack.c.b16 %v957, %v956
    %v994 = vpack.c.b16 %v959, %v958
    %v995 = vpack.c.b16 %v961, %v960
    %v996 = vpack.c.b16 %v963, %v962
    %v997 = vpack.c.b16 %v965, %v964
    %v998 = vpack.c.b16 %v967, %v966
    %v999 = vpack.c.b16 %v969, %v968
    %v1000 = vpack.c.b16 %v971, %v970
    %v1001 = vpack.c.b16 %v973, %v972
    %v1002 = vpack.c.b16 %v975, %v974
    %v1003 = vpack.c.b16 %v977, %v976
    %v1004 = vpack.c.b16 %v979, %v978
    %v1005 = vpack.c.b16 %v981, %v980
    %1030 = vmatprep.subr.bf16.mxu0 0
    %1031 = vmatpush1.bf16.msra.mxu0 %v989
    %1032 = vmatprep.subr.bf16.mxu0 0
    %1033 = vmatpush1.bf16.msra.mxu0 %v988
    %1034 = vmatprep.subr.bf16.mxu0 0
    %1035 = vmatpush1.bf16.msra.mxu0 %v987
    %1036 = vmatprep.subr.bf16.mxu0 0
    %1037 = vmatpush1.bf16.msra.mxu0 %v986
    %1038 = vmatprep.subr.bf16.mxu0 0
    %1039 = vmatpush1.bf16.msra.mxu0 %v985
    %1040 = vmatprep.subr.bf16.mxu0 0
    %1041 = vmatpush1.bf16.msra.mxu0 %v984
    %1042 = vmatprep.subr.bf16.mxu0 0
    %1043 = vmatpush1.bf16.msra.mxu0 %v983
    %1044 = vmatprep.subr.bf16.mxu0 0
    %1045 = vmatpush1.bf16.msra.mxu0 %v982
    %1046 = vmatprep.subr.bf16.mxu0 0
    %1047 = vmatpush2.bf16.msra.mxu0 %v997
    %1048 = vmatprep.subr.bf16.mxu0 0
    %1049 = vmatpush2.bf16.msra.mxu0 %v996
    %1050 = vmatprep.subr.bf16.mxu0 0
    %1051 = vmatpush2.bf16.msra.mxu0 %v995
    %1052 = vmatprep.subr.bf16.mxu0 0
    %1053 = vmatpush2.bf16.msra.mxu0 %v994
    %1054 = vmatprep.subr.bf16.mxu0 0
    %1055 = vmatpush2.bf16.msra.mxu0 %v993
    %1056 = vmatprep.subr.bf16.mxu0 0
    %1057 = vmatpush2.bf16.msra.mxu0 %v992
    %1058 = vmatprep.subr.bf16.mxu0 0
    %1059 = vmatpush2.bf16.msra.mxu0 %v991
    %1060 = vmatprep.subr.bf16.mxu0 0
    %1061 = vmatpush2.bf16.msra.mxu0 %v990
    %1062 = vmatprep.mubr.bf16.mxu0 %v884
    %1063 = vmatmul.mubr.bf16.gmra.mxu0 %v883
    %v1064 = vpop.f32.mrf.mxu0
    %v1065 = vadd.f32 0.0, %v1064
    %v1066 = vpop.f32.mrf.mxu0
    %v1067 = vpop.f32.mrf.mxu0
    %v1068 = vpop.f32.mrf.mxu0
    %1069 = vdwg.mxu0
    %1070 = vmatprep.subr.bf16.mxu0 0
    %1071 = vmatpush1.bf16.msra.mxu0 %v1005
    %1072 = vmatprep.subr.bf16.mxu0 0
    %1073 = vmatpush1.bf16.msra.mxu0 %v1004
    %1074 = vmatprep.subr.bf16.mxu0 0
    %1075 = vmatpush1.bf16.msra.mxu0 %v1003
    %1076 = vmatprep.subr.bf16.mxu0 0
    %1077 = vmatpush1.bf16.msra.mxu0 %v1002
    %1078 = vmatprep.subr.bf16.mxu0 0
    %1079 = vmatpush1.bf16.msra.mxu0 %v1001
    %1080 = vmatprep.subr.bf16.mxu0 0
    %1081 = vmatpush1.bf16.msra.mxu0 %v1000
    %1082 = vmatprep.subr.bf16.mxu0 0
    %1083 = vmatpush1.bf16.msra.mxu0 %v999
    %1084 = vmatprep.subr.bf16.mxu0 0
    %1085 = vmatpush1.bf16.msra.mxu0 %v998
    %1086 = vmatprep.subr.bf16.mxu0 0
    %1087 = vmatpush2.bf16.msra.mxu0 0
    %1088 = vmatprep.subr.bf16.mxu0 0
    %1089 = vmatpush2.bf16.msra.mxu0 0
    %1090 = vmatprep.subr.bf16.mxu0 0
    %1091 = vmatpush2.bf16.msra.mxu0 0
    %1092 = vmatprep.subr.bf16.mxu0 0
    %1093 = vmatpush2.bf16.msra.mxu0 0
    %1094 = vmatprep.subr.bf16.mxu0 0
    %1095 = vmatpush2.bf16.msra.mxu0 0
    %1096 = vmatprep.subr.bf16.mxu0 0
    %1097 = vmatpush2.bf16.msra.mxu0 0
    %1098 = vmatprep.subr.bf16.mxu0 0
    %1099 = vmatpush2.bf16.msra.mxu0 0
    %1100 = vmatprep.subr.bf16.mxu0 0
    %1101 = vmatpush2.bf16.msra.mxu0 0
    %1102 = vmatprep.mubr.bf16.mxu0 0
    %1103 = vmatmul.mubr.bf16.gmra.mxu0 %v885
    %v1104 = vpop.f32.mrf.mxu0
    %v1105 = vadd.f32 %v1065, %v1104
    %v1106 = vpop.f32.mrf.mxu0
    %v1107 = vpop.f32.mrf.mxu0
    %v1108 = vpop.f32.mrf.mxu0
    %1109 = vdwg.mxu0
    %1111 = vrot.lane.b32.xlu0 %v1105, 96
    %v1112 = vpop.permute.xlu0 %1111
    %v1114 = vmax.f32 %v1105, %v1112
    %1116 = vrot.lane.b32.xlu0 %v1114, 64
    %v1117 = vpop.permute.xlu0 %1116
    %v1119 = vmax.f32 %v1114, %v1117
    %v1120 = vadd.f32 %v1119, %v174
    %v1121 = vmax.f32 %v1120, 0.0
    %v1122 = vld [vmem:[%s1] sm:$0xff]
    %v1123 = vld [vmem:[%s1 + $0x8] sm:$0xff]
    %v1124 = vld [vmem:[%s1 + $0x10] sm:$0xff]
    %v1125 = vld [vmem:[%s1 + $0x18] sm:$0xff]
    %v1126 = vld [vmem:[%s1 + $0x20] sm:$0xff]
    %v1127 = vpack.c.bf16 %v1123, %v1122
    %v1128 = vpack.c.bf16 %v1125, %v1124
    %v1129 = vpack.c.bf16 %v1126, %v1126
    %v1130 = vld [vmem:[#allocation2 + $0x30] sm:$0xff]
    %v1131 = vld [vmem:[#allocation2 + $0x38] sm:$0xff]
    %v1132 = vld [vmem:[#allocation2 + $0x40] sm:$0xff]
    %v1133 = vld [vmem:[#allocation2 + $0x48] sm:$0xff]
    %v1134 = vld [vmem:[#allocation2 + $0x50] sm:$0xff]
    %v1135 = vld [vmem:[#allocation2 + $0x58] sm:$0xff]
    %v1136 = vld [vmem:[#allocation2 + $0x90] sm:$0xff]
    %v1137 = vld [vmem:[#allocation2 + $0x98] sm:$0xff]
    %v1138 = vld [vmem:[#allocation2 + $0xa0] sm:$0xff]
    %v1139 = vld [vmem:[#allocation2 + $0xa8] sm:$0xff]
    %v1140 = vld [vmem:[#allocation2 + $0xb0] sm:$0xff]
    %v1141 = vld [vmem:[#allocation2 + $0xb8] sm:$0xff]
    %v1142 = vld [vmem:[#allocation2 + $0xf0] sm:$0xff]
    %v1143 = vld [vmem:[#allocation2 + $0xf8] sm:$0xff]
    %v1144 = vld [vmem:[#allocation2 + $0x100] sm:$0xff]
    %v1145 = vld [vmem:[#allocation2 + $0x108] sm:$0xff]
    %v1146 = vld [vmem:[#allocation2 + $0x110] sm:$0xff]
    %v1147 = vld [vmem:[#allocation2 + $0x118] sm:$0xff]
    %v1148 = vld [vmem:[#allocation2 + $0x150] sm:$0xff]
    %v1149 = vld [vmem:[#allocation2 + $0x158] sm:$0xff]
    %v1150 = vld [vmem:[#allocation2 + $0x160] sm:$0xff]
    %v1151 = vld [vmem:[#allocation2 + $0x168] sm:$0xff]
    %v1152 = vld [vmem:[#allocation2 + $0x170] sm:$0xff]
    %v1153 = vld [vmem:[#allocation2 + $0x178] sm:$0xff]
    %v1154 = vld [vmem:[#allocation2 + $0x1b0] sm:$0xff]
    %v1155 = vld [vmem:[#allocation2 + $0x1b8] sm:$0xff]
    %v1156 = vld [vmem:[#allocation2 + $0x1c0] sm:$0xff]
    %v1157 = vld [vmem:[#allocation2 + $0x1c8] sm:$0xff]
    %v1158 = vld [vmem:[#allocation2 + $0x1d0] sm:$0xff]
    %v1159 = vld [vmem:[#allocation2 + $0x1d8] sm:$0xff]
    %v1160 = vld [vmem:[#allocation2 + $0x210] sm:$0xff]
    %v1161 = vld [vmem:[#allocation2 + $0x218] sm:$0xff]
    %v1162 = vld [vmem:[#allocation2 + $0x220] sm:$0xff]
    %v1163 = vld [vmem:[#allocation2 + $0x228] sm:$0xff]
    %v1164 = vld [vmem:[#allocation2 + $0x230] sm:$0xff]
    %v1165 = vld [vmem:[#allocation2 + $0x238] sm:$0xff]
    %v1166 = vld [vmem:[#allocation2 + $0x270] sm:$0xff]
    %v1167 = vld [vmem:[#allocation2 + $0x278] sm:$0xff]
    %v1168 = vld [vmem:[#allocation2 + $0x280] sm:$0xff]
    %v1169 = vld [vmem:[#allocation2 + $0x288] sm:$0xff]
    %v1170 = vld [vmem:[#allocation2 + $0x290] sm:$0xff]
    %v1171 = vld [vmem:[#allocation2 + $0x298] sm:$0xff]
    %v1172 = vld [vmem:[#allocation2 + $0x2d0] sm:$0xff]
    %v1173 = vld [vmem:[#allocation2 + $0x2d8] sm:$0xff]
    %v1174 = vld [vmem:[#allocation2 + $0x2e0] sm:$0xff]
    %v1175 = vld [vmem:[#allocation2 + $0x2e8] sm:$0xff]
    %v1176 = vld [vmem:[#allocation2 + $0x2f0] sm:$0xff]
    %v1177 = vld [vmem:[#allocation2 + $0x2f8] sm:$0xff]
    %v1178 = vld [vmem:[#allocation2 + $0x330] sm:$0xff]
    %v1179 = vld [vmem:[#allocation2 + $0x338] sm:$0xff]
    %v1180 = vld [vmem:[#allocation2 + $0x340] sm:$0xff]
    %v1181 = vld [vmem:[#allocation2 + $0x348] sm:$0xff]
    %v1182 = vld [vmem:[#allocation2 + $0x350] sm:$0xff]
    %v1183 = vld [vmem:[#allocation2 + $0x358] sm:$0xff]
    %v1184 = vld [vmem:[#allocation2 + $0x390] sm:$0xff]
    %v1185 = vld [vmem:[#allocation2 + $0x398] sm:$0xff]
    %v1186 = vld [vmem:[#allocation2 + $0x3a0] sm:$0xff]
    %v1187 = vld [vmem:[#allocation2 + $0x3a8] sm:$0xff]
    %v1188 = vld [vmem:[#allocation2 + $0x3b0] sm:$0xff]
    %v1189 = vld [vmem:[#allocation2 + $0x3b8] sm:$0xff]
    %v1190 = vld [vmem:[#allocation2 + $0x3f0] sm:$0xff]
    %v1191 = vld [vmem:[#allocation2 + $0x3f8] sm:$0xff]
    %v1192 = vld [vmem:[#allocation2 + $0x400] sm:$0xff]
    %v1193 = vld [vmem:[#allocation2 + $0x408] sm:$0xff]
    %v1194 = vld [vmem:[#allocation2 + $0x410] sm:$0xff]
    %v1195 = vld [vmem:[#allocation2 + $0x418] sm:$0xff]
    %v1196 = vld [vmem:[#allocation2 + $0x450] sm:$0xff]
    %v1197 = vld [vmem:[#allocation2 + $0x458] sm:$0xff]
    %v1198 = vld [vmem:[#allocation2 + $0x460] sm:$0xff]
    %v1199 = vld [vmem:[#allocation2 + $0x468] sm:$0xff]
    %v1200 = vld [vmem:[#allocation2 + $0x470] sm:$0xff]
    %v1201 = vld [vmem:[#allocation2 + $0x478] sm:$0xff]
    %v1202 = vld [vmem:[#allocation2 + $0x4b0] sm:$0x33]
    %v1203 = vld [vmem:[#allocation2 + $0x4b8] sm:$0x33]
    %v1204 = vld [vmem:[#allocation2 + $0x4c0] sm:$0x33]
    %v1205 = vld [vmem:[#allocation2 + $0x4c8] sm:$0x33]
    %v1206 = vld [vmem:[#allocation2 + $0x4d0] sm:$0x33]
    %v1207 = vld [vmem:[#allocation2 + $0x4d8] sm:$0x33]
    %s1208 = scalar_lea.vmem %s7, 1
    %v1209 = vld [vmem:[%s1208] ss:$8 sm:$0x7]
    %v1210 = vld [vmem:[%s3 + $0x4] sm:$0xf]
    %v1211 = vld [vmem:[%s3 + $0xc] sm:$0xf]
    %v1212 = vld [vmem:[%s3 + $0x14] sm:$0xf]
    %v1213 = vld [vmem:[%s3 + $0x1c] sm:$0xf]
    %v1214 = vld [vmem:[%s3 + $0x24] sm:$0xf]
    %v1215 = vld [vmem:[%s3 + $0x2c] sm:$0xf]
    %v1216 = vld [vmem:[%s3 + $0x34] sm:$0xf]
    %v1217 = vld [vmem:[%s3 + $0x3c] sm:$0xf]
    %v1218 = vld [vmem:[%s3 + $0x44] sm:$0xf]
    %v1219 = vld [vmem:[%s3 + $0x4c] sm:$0xf]
    %v1220 = vld [vmem:[%s3 + $0x54] sm:$0xf]
    %v1221 = vld [vmem:[%s3 + $0x5c] sm:$0xf]
    %v1222 = vld [vmem:[%s3 + $0x64] sm:$0xf]
    %v1223 = vld [vmem:[%s3 + $0x6c] sm:$0xf]
    %v1224 = vld [vmem:[%s3 + $0x74] sm:$0xf]
    %v1225 = vld [vmem:[%s3 + $0x7c] sm:$0xf]
    %v1226 = vld [vmem:[%s3 + $0x84] sm:$0xf]
    %v1227 = vld [vmem:[%s3 + $0x8c] sm:$0xf]
    %v1228 = vld [vmem:[%s3 + $0x94] sm:$0xf]
    %v1229 = vld [vmem:[%s3 + $0x9c] sm:$0xf]
    %v1230 = vld [vmem:[%s3 + $0xa4] sm:$0xf]
    %v1231 = vld [vmem:[%s3 + $0xac] sm:$0xf]
    %v1232 = vld [vmem:[%s3 + $0xb4] sm:$0xf]
    %v1233 = vld [vmem:[%s3 + $0xbc] sm:$0xf]
    %v1234 = vld [vmem:[%s3 + $0xc4] sm:$0xf]
    %v1235 = vld [vmem:[%s3 + $0xcc] sm:$0xf]
    %v1236 = vld [vmem:[%s3 + $0xd4] sm:$0xf]
    %v1237 = vld [vmem:[%s3 + $0xdc] sm:$0xf]
    %v1238 = vld [vmem:[%s3 + $0xe4] sm:$0xf]
    %v1239 = vld [vmem:[%s3 + $0xec] sm:$0xf]
    %v1240 = vld [vmem:[%s3 + $0xf4] sm:$0xf]
    %v1241 = vld [vmem:[%s3 + $0xfc] sm:$0xf]
    %v1242 = vld [vmem:[%s3 + $0x104] sm:$0xf]
    %v1243 = vld [vmem:[%s3 + $0x10c] sm:$0xf]
    %v1244 = vld [vmem:[%s3 + $0x114] sm:$0xf]
    %v1245 = vld [vmem:[%s3 + $0x11c] sm:$0xf]
    %v1246 = vld [vmem:[%s3 + $0x124] sm:$0xf]
    %v1247 = vld [vmem:[%s3 + $0x12c] sm:$0xf]
    %v1248 = vld [vmem:[%s3 + $0x134] sm:$0xf]
    %v1249 = vld [vmem:[%s3 + $0x13c] sm:$0xf]
    %v1250 = vld [vmem:[%s3 + $0x144] sm:$0xf]
    %v1251 = vld [vmem:[%s3 + $0x14c] sm:$0xf]
    %v1252 = vld [vmem:[%s3 + $0x154] sm:$0xf]
    %v1253 = vld [vmem:[%s3 + $0x15c] sm:$0xf]
    %v1254 = vld [vmem:[%s3 + $0x164] sm:$0xf]
    %v1255 = vld [vmem:[%s3 + $0x16c] sm:$0xf]
    %v1256 = vld [vmem:[%s3 + $0x174] sm:$0xf]
    %v1257 = vld [vmem:[%s3 + $0x17c] sm:$0xf]
    %v1258 = vld [vmem:[%s7 + $0x6] ss:$0 sm:$0xff]
    %v1337 = vunpack.c.l.b16 %v1130
    %v1338 = vunpack.c.h.b16 %v1130
    %v1339 = vunpack.c.l.b16 %v1131
    %v1340 = vunpack.c.h.b16 %v1131
    %v1341 = vunpack.c.l.b16 %v1132
    %v1342 = vunpack.c.h.b16 %v1132
    %v1343 = vunpack.c.l.b16 %v1133
    %v1344 = vunpack.c.h.b16 %v1133
    %v1345 = vunpack.c.l.b16 %v1134
    %v1346 = vunpack.c.h.b16 %v1134
    %v1347 = vunpack.c.l.b16 %v1135
    %v1348 = vunpack.c.h.b16 %v1135
    %v1349 = vunpack.c.l.b16 %v1136
    %v1350 = vunpack.c.h.b16 %v1136
    %v1351 = vunpack.c.l.b16 %v1137
    %v1352 = vunpack.c.h.b16 %v1137
    %v1353 = vunpack.c.l.b16 %v1138
    %v1354 = vunpack.c.h.b16 %v1138
    %v1355 = vunpack.c.l.b16 %v1139
    %v1356 = vunpack.c.h.b16 %v1139
    %v1357 = vunpack.c.l.b16 %v1140
    %v1358 = vunpack.c.h.b16 %v1140
    %v1359 = vunpack.c.l.b16 %v1141
    %v1360 = vunpack.c.h.b16 %v1141
    %v1361 = vunpack.c.l.b16 %v1142
    %v1362 = vunpack.c.h.b16 %v1142
    %v1363 = vunpack.c.l.b16 %v1143
    %v1364 = vunpack.c.h.b16 %v1143
    %v1365 = vunpack.c.l.b16 %v1144
    %v1366 = vunpack.c.h.b16 %v1144
    %v1367 = vunpack.c.l.b16 %v1145
    %v1368 = vunpack.c.h.b16 %v1145
    %v1369 = vunpack.c.l.b16 %v1146
    %v1370 = vunpack.c.h.b16 %v1146
    %v1371 = vunpack.c.l.b16 %v1147
    %v1372 = vunpack.c.h.b16 %v1147
    %v1373 = vunpack.c.l.b16 %v1148
    %v1374 = vunpack.c.h.b16 %v1148
    %v1375 = vunpack.c.l.b16 %v1149
    %v1376 = vunpack.c.h.b16 %v1149
    %v1377 = vunpack.c.l.b16 %v1150
    %v1378 = vunpack.c.h.b16 %v1150
    %v1379 = vunpack.c.l.b16 %v1151
    %v1380 = vunpack.c.h.b16 %v1151
    %v1381 = vunpack.c.l.b16 %v1152
    %v1382 = vunpack.c.h.b16 %v1152
    %v1383 = vunpack.c.l.b16 %v1153
    %v1384 = vunpack.c.h.b16 %v1153
    %v1385 = vunpack.c.l.b16 %v1154
    %v1386 = vunpack.c.h.b16 %v1154
    %v1387 = vunpack.c.l.b16 %v1155
    %v1388 = vunpack.c.h.b16 %v1155
    %v1389 = vunpack.c.l.b16 %v1156
    %v1390 = vunpack.c.h.b16 %v1156
    %v1391 = vunpack.c.l.b16 %v1157
    %v1392 = vunpack.c.h.b16 %v1157
    %v1393 = vunpack.c.l.b16 %v1158
    %v1394 = vunpack.c.h.b16 %v1158
    %v1395 = vunpack.c.l.b16 %v1159
    %v1396 = vunpack.c.h.b16 %v1159
    %v1397 = vunpack.c.l.b16 %v1160
    %v1398 = vunpack.c.h.b16 %v1160
    %v1399 = vunpack.c.l.b16 %v1161
    %v1400 = vunpack.c.h.b16 %v1161
    %v1401 = vunpack.c.l.b16 %v1162
    %v1402 = vunpack.c.h.b16 %v1162
    %v1403 = vunpack.c.l.b16 %v1163
    %v1404 = vunpack.c.h.b16 %v1163
    %v1405 = vunpack.c.l.b16 %v1164
    %v1406 = vunpack.c.h.b16 %v1164
    %v1407 = vunpack.c.l.b16 %v1165
    %v1408 = vunpack.c.h.b16 %v1165
    %v1409 = vunpack.c.l.b16 %v1166
    %v1410 = vunpack.c.h.b16 %v1166
    %v1411 = vunpack.c.l.b16 %v1167
    %v1412 = vunpack.c.h.b16 %v1167
    %v1413 = vunpack.c.l.b16 %v1168
    %v1414 = vunpack.c.h.b16 %v1168
    %v1415 = vunpack.c.l.b16 %v1169
    %v1416 = vunpack.c.h.b16 %v1169
    %v1417 = vunpack.c.l.b16 %v1170
    %v1418 = vunpack.c.h.b16 %v1170
    %v1419 = vunpack.c.l.b16 %v1171
    %v1420 = vunpack.c.h.b16 %v1171
    %v1421 = vunpack.c.l.b16 %v1172
    %v1422 = vunpack.c.h.b16 %v1172
    %v1423 = vunpack.c.l.b16 %v1173
    %v1424 = vunpack.c.h.b16 %v1173
    %v1425 = vunpack.c.l.b16 %v1174
    %v1426 = vunpack.c.h.b16 %v1174
    %v1427 = vunpack.c.l.b16 %v1175
    %v1428 = vunpack.c.h.b16 %v1175
    %v1429 = vunpack.c.l.b16 %v1176
    %v1430 = vunpack.c.h.b16 %v1176
    %v1431 = vunpack.c.l.b16 %v1177
    %v1432 = vunpack.c.h.b16 %v1177
    %v1433 = vunpack.c.l.b16 %v1178
    %v1434 = vunpack.c.h.b16 %v1178
    %v1435 = vunpack.c.l.b16 %v1179
    %v1436 = vunpack.c.h.b16 %v1179
    %v1437 = vunpack.c.l.b16 %v1180
    %v1438 = vunpack.c.h.b16 %v1180
    %v1439 = vunpack.c.l.b16 %v1181
    %v1440 = vunpack.c.h.b16 %v1181
    %v1441 = vunpack.c.l.b16 %v1182
    %v1442 = vunpack.c.h.b16 %v1182
    %v1443 = vunpack.c.l.b16 %v1183
    %v1444 = vunpack.c.h.b16 %v1183
    %v1445 = vunpack.c.l.b16 %v1184
    %v1446 = vunpack.c.h.b16 %v1184
    %v1447 = vunpack.c.l.b16 %v1185
    %v1448 = vunpack.c.h.b16 %v1185
    %v1449 = vunpack.c.l.b16 %v1186
    %v1450 = vunpack.c.h.b16 %v1186
    %v1451 = vunpack.c.l.b16 %v1187
    %v1452 = vunpack.c.h.b16 %v1187
    %v1453 = vunpack.c.l.b16 %v1188
    %v1454 = vunpack.c.h.b16 %v1188
    %v1455 = vunpack.c.l.b16 %v1189
    %v1456 = vunpack.c.h.b16 %v1189
    %v1457 = vunpack.c.l.b16 %v1190
    %v1458 = vunpack.c.h.b16 %v1190
    %v1459 = vunpack.c.l.b16 %v1191
    %v1460 = vunpack.c.h.b16 %v1191
    %v1461 = vunpack.c.l.b16 %v1192
    %v1462 = vunpack.c.h.b16 %v1192
    %v1463 = vunpack.c.l.b16 %v1193
    %v1464 = vunpack.c.h.b16 %v1193
    %v1465 = vunpack.c.l.b16 %v1194
    %v1466 = vunpack.c.h.b16 %v1194
    %v1467 = vunpack.c.l.b16 %v1195
    %v1468 = vunpack.c.h.b16 %v1195
    %v1469 = vunpack.c.l.b16 %v1196
    %v1470 = vunpack.c.h.b16 %v1196
    %v1471 = vunpack.c.l.b16 %v1197
    %v1472 = vunpack.c.h.b16 %v1197
    %v1473 = vunpack.c.l.b16 %v1198
    %v1474 = vunpack.c.h.b16 %v1198
    %v1475 = vunpack.c.l.b16 %v1199
    %v1476 = vunpack.c.h.b16 %v1199
    %v1477 = vunpack.c.l.b16 %v1200
    %v1478 = vunpack.c.h.b16 %v1200
    %v1479 = vunpack.c.l.b16 %v1201
    %v1480 = vunpack.c.h.b16 %v1201
    %v1481 = vunpack.c.l.b16 %v1202
    %v1482 = vunpack.c.h.b16 %v1202
    %v1483 = vunpack.c.l.b16 %v1203
    %v1484 = vunpack.c.h.b16 %v1203
    %v1485 = vunpack.c.l.b16 %v1204
    %v1486 = vunpack.c.h.b16 %v1204
    %v1487 = vunpack.c.l.b16 %v1205
    %v1488 = vunpack.c.h.b16 %v1205
    %v1489 = vunpack.c.l.b16 %v1206
    %v1490 = vunpack.c.h.b16 %v1206
    %v1491 = vunpack.c.l.b16 %v1207
    %v1492 = vunpack.c.h.b16 %v1207
    %v1493 = vpack.c.b16 %v1349, %v1337
    %v1494 = vpack.c.b16 %v1350, %v1338
    %v1495 = vpack.c.b16 %v1351, %v1339
    %v1496 = vpack.c.b16 %v1352, %v1340
    %v1497 = vpack.c.b16 %v1353, %v1341
    %v1498 = vpack.c.b16 %v1354, %v1342
    %v1499 = vpack.c.b16 %v1355, %v1343
    %v1500 = vpack.c.b16 %v1356, %v1344
    %v1501 = vpack.c.b16 %v1357, %v1345
    %v1502 = vpack.c.b16 %v1358, %v1346
    %v1503 = vpack.c.b16 %v1359, %v1347
    %v1504 = vpack.c.b16 %v1360, %v1348
    %v1505 = vpack.c.b16 %v1373, %v1361
    %v1506 = vpack.c.b16 %v1374, %v1362
    %v1507 = vpack.c.b16 %v1375, %v1363
    %v1508 = vpack.c.b16 %v1376, %v1364
    %v1509 = vpack.c.b16 %v1377, %v1365
    %v1510 = vpack.c.b16 %v1378, %v1366
    %v1511 = vpack.c.b16 %v1379, %v1367
    %v1512 = vpack.c.b16 %v1380, %v1368
    %v1513 = vpack.c.b16 %v1381, %v1369
    %v1514 = vpack.c.b16 %v1382, %v1370
    %v1515 = vpack.c.b16 %v1383, %v1371
    %v1516 = vpack.c.b16 %v1384, %v1372
    %v1517 = vpack.c.b16 %v1397, %v1385
    %v1518 = vpack.c.b16 %v1398, %v1386
    %v1519 = vpack.c.b16 %v1399, %v1387
    %v1520 = vpack.c.b16 %v1400, %v1388
    %v1521 = vpack.c.b16 %v1401, %v1389
    %v1522 = vpack.c.b16 %v1402, %v1390
    %v1523 = vpack.c.b16 %v1403, %v1391
    %v1524 = vpack.c.b16 %v1404, %v1392
    %v1525 = vpack.c.b16 %v1405, %v1393
    %v1526 = vpack.c.b16 %v1406, %v1394
    %v1527 = vpack.c.b16 %v1407, %v1395
    %v1528 = vpack.c.b16 %v1408, %v1396
    %v1529 = vpack.c.b16 %v1421, %v1409
    %v1530 = vpack.c.b16 %v1422, %v1410
    %v1531 = vpack.c.b16 %v1423, %v1411
    %v1532 = vpack.c.b16 %v1424, %v1412
    %v1533 = vpack.c.b16 %v1425, %v1413
    %v1534 = vpack.c.b16 %v1426, %v1414
    %v1535 = vpack.c.b16 %v1427, %v1415
    %v1536 = vpack.c.b16 %v1428, %v1416
    %v1537 = vpack.c.b16 %v1429, %v1417
    %v1538 = vpack.c.b16 %v1430, %v1418
    %v1539 = vpack.c.b16 %v1431, %v1419
    %v1540 = vpack.c.b16 %v1432, %v1420
    %v1541 = vpack.c.b16 %v1445, %v1433
    %v1542 = vpack.c.b16 %v1446, %v1434
    %v1543 = vpack.c.b16 %v1447, %v1435
    %v1544 = vpack.c.b16 %v1448, %v1436
    %v1545 = vpack.c.b16 %v1449, %v1437
    %v1546 = vpack.c.b16 %v1450, %v1438
    %v1547 = vpack.c.b16 %v1451, %v1439
    %v1548 = vpack.c.b16 %v1452, %v1440
    %v1549 = vpack.c.b16 %v1453, %v1441
    %v1550 = vpack.c.b16 %v1454, %v1442
    %v1551 = vpack.c.b16 %v1455, %v1443
    %v1552 = vpack.c.b16 %v1456, %v1444
    %v1553 = vpack.c.b16 %v1469, %v1457
    %v1554 = vpack.c.b16 %v1470, %v1458
    %v1555 = vpack.c.b16 %v1471, %v1459
    %v1556 = vpack.c.b16 %v1472, %v1460
    %v1557 = vpack.c.b16 %v1473, %v1461
    %v1558 = vpack.c.b16 %v1474, %v1462
    %v1559 = vpack.c.b16 %v1475, %v1463
    %v1560 = vpack.c.b16 %v1476, %v1464
    %v1561 = vpack.c.b16 %v1477, %v1465
    %v1562 = vpack.c.b16 %v1478, %v1466
    %v1563 = vpack.c.b16 %v1479, %v1467
    %v1564 = vpack.c.b16 %v1480, %v1468
    %v1565 = vpack.c.b16 %v1481, %v1481
    %v1566 = vpack.c.b16 %v1482, %v1482
    %v1567 = vpack.c.b16 %v1483, %v1483
    %v1568 = vpack.c.b16 %v1484, %v1484
    %v1569 = vpack.c.b16 %v1485, %v1485
    %v1570 = vpack.c.b16 %v1486, %v1486
    %v1571 = vpack.c.b16 %v1487, %v1487
    %v1572 = vpack.c.b16 %v1488, %v1488
    %v1573 = vpack.c.b16 %v1489, %v1489
    %v1574 = vpack.c.b16 %v1490, %v1490
    %v1575 = vpack.c.b16 %v1491, %v1491
    %v1576 = vpack.c.b16 %v1492, %v1492
    %v1650 = vsel %vm565, %v1127, 0
    %v1653 = vsel %vm565, %v1128, 0
    %v1656 = vsel %vm565, %v1129, 0
    %v1659 = vsel %vm569, %v1565, 0
    %v1662 = vsel %vm569, %v1566, 0
    %v1665 = vsel %vm569, %v1567, 0
    %v1668 = vsel %vm569, %v1568, 0
    %v1671 = vsel %vm569, %v1569, 0
    %v1674 = vsel %vm569, %v1570, 0
    %v1677 = vsel %vm569, %v1571, 0
    %v1680 = vsel %vm569, %v1572, 0
    %v1683 = vsel %vm569, %v1573, 0
    %v1686 = vsel %vm569, %v1574, 0
    %v1689 = vsel %vm569, %v1575, 0
    %v1692 = vsel %vm569, %v1576, 0
    %1694 = vmatprep.subr.bf16.mxu0 0
    %1695 = vmatpush1.bf16.msra.mxu0 0
    %1696 = vmatprep.subr.bf16.mxu0 %v1662
    %1697 = vmatpush1.bf16.msra.mxu0 %v1659
    %1698 = vmatprep.subr.bf16.mxu0 %v1554
    %1699 = vmatpush1.bf16.msra.mxu0 %v1553
    %1700 = vmatprep.subr.bf16.mxu0 %v1542
    %1701 = vmatpush1.bf16.msra.mxu0 %v1541
    %1702 = vmatprep.subr.bf16.mxu0 %v1530
    %1703 = vmatpush1.bf16.msra.mxu0 %v1529
    %1704 = vmatprep.subr.bf16.mxu0 %v1518
    %1705 = vmatpush1.bf16.msra.mxu0 %v1517
    %1706 = vmatprep.subr.bf16.mxu0 %v1506
    %1707 = vmatpush1.bf16.msra.mxu0 %v1505
    %1708 = vmatprep.subr.bf16.mxu0 %v1494
    %1709 = vmatpush1.bf16.msra.mxu0 %v1493
    %1710 = vmatprep.subr.bf16.mxu0 0
    %1711 = vmatpush2.bf16.msra.mxu0 0
    %1712 = vmatprep.subr.bf16.mxu0 0
    %1713 = vmatpush2.bf16.msra.mxu0 0
    %1714 = vmatprep.subr.bf16.mxu0 0
    %1715 = vmatpush2.bf16.msra.mxu0 0
    %1716 = vmatprep.subr.bf16.mxu0 0
    %1717 = vmatpush2.bf16.msra.mxu0 0
    %1718 = vmatprep.subr.bf16.mxu0 0
    %1719 = vmatpush2.bf16.msra.mxu0 0
    %1720 = vmatprep.subr.bf16.mxu0 0
    %1721 = vmatpush2.bf16.msra.mxu0 0
    %1722 = vmatprep.subr.bf16.mxu0 0
    %1723 = vmatpush2.bf16.msra.mxu0 0
    %1724 = vmatprep.subr.bf16.mxu0 0
    %1725 = vmatpush2.bf16.msra.mxu0 0
    %1726 = vmatprep.mubr.bf16.mxu0 0
    %1727 = vmatmul.mubr.bf16.gmra.mxu0 %v1650
    %v1728 = vpop.f32.mrf.mxu0
    %v1729 = vadd.f32 0.0, %v1728
    %v1730 = vpop.f32.mrf.mxu0
    %v1731 = vadd.f32 0.0, %v1730
    %v1732 = vpop.f32.mrf.mxu0
    %v1733 = vadd.f32 0.0, %v1732
    %v1734 = vpop.f32.mrf.mxu0
    %v1735 = vadd.f32 0.0, %v1734
    %1736 = vmatprep.mubr.bf16.mxu0 0
    %1737 = vmatmul.mubr.bf16.gmra.mxu0 %v1653
    %v1738 = vpop.f32.mrf.mxu0
    %v1739 = vadd.f32 0.0, %v1738
    %v1740 = vpop.f32.mrf.mxu0
    %v1741 = vadd.f32 0.0, %v1740
    %v1742 = vpop.f32.mrf.mxu0
    %v1743 = vadd.f32 0.0, %v1742
    %v1744 = vpop.f32.mrf.mxu0
    %v1745 = vadd.f32 0.0, %v1744
    %1746 = vmatprep.mubr.bf16.mxu0 0
    %1747 = vmatmul.mubr.bf16.gmra.mxu0 %v1656
    %v1748 = vpop.f32.mrf.mxu0
    %v1749 = vadd.f32 0.0, %v1748
    %v1750 = vpop.f32.mrf.mxu0
    %v1751 = vadd.f32 0.0, %v1750
    %v1752 = vpop.f32.mrf.mxu0
    %v1753 = vpop.f32.mrf.mxu0
    %1754 = vdwg.mxu0
    %1755 = vmatprep.subr.bf16.mxu0 0
    %1756 = vmatpush1.bf16.msra.mxu0 0
    %1757 = vmatprep.subr.bf16.mxu0 %v1668
    %1758 = vmatpush1.bf16.msra.mxu0 %v1665
    %1759 = vmatprep.subr.bf16.mxu0 %v1556
    %1760 = vmatpush1.bf16.msra.mxu0 %v1555
    %1761 = vmatprep.subr.bf16.mxu0 %v1544
    %1762 = vmatpush1.bf16.msra.mxu0 %v1543
    %1763 = vmatprep.subr.bf16.mxu0 %v1532
    %1764 = vmatpush1.bf16.msra.mxu0 %v1531
    %1765 = vmatprep.subr.bf16.mxu0 %v1520
    %1766 = vmatpush1.bf16.msra.mxu0 %v1519
    %1767 = vmatprep.subr.bf16.mxu0 %v1508
    %1768 = vmatpush1.bf16.msra.mxu0 %v1507
    %1769 = vmatprep.subr.bf16.mxu0 %v1496
    %1770 = vmatpush1.bf16.msra.mxu0 %v1495
    %1771 = vmatprep.subr.bf16.mxu0 0
    %1772 = vmatpush2.bf16.msra.mxu0 0
    %1773 = vmatprep.subr.bf16.mxu0 0
    %1774 = vmatpush2.bf16.msra.mxu0 0
    %1775 = vmatprep.subr.bf16.mxu0 0
    %1776 = vmatpush2.bf16.msra.mxu0 0
    %1777 = vmatprep.subr.bf16.mxu0 0
    %1778 = vmatpush2.bf16.msra.mxu0 0
    %1779 = vmatprep.subr.bf16.mxu0 0
    %1780 = vmatpush2.bf16.msra.mxu0 0
    %1781 = vmatprep.subr.bf16.mxu0 0
    %1782 = vmatpush2.bf16.msra.mxu0 0
    %1783 = vmatprep.subr.bf16.mxu0 0
    %1784 = vmatpush2.bf16.msra.mxu0 0
    %1785 = vmatprep.subr.bf16.mxu0 0
    %1786 = vmatpush2.bf16.msra.mxu0 0
    %1787 = vmatprep.mubr.bf16.mxu0 0
    %1788 = vmatmul.mubr.bf16.gmra.mxu0 %v1650
    %v1789 = vpop.f32.mrf.mxu0
    %v1790 = vadd.f32 0.0, %v1789
    %v1791 = vpop.f32.mrf.mxu0
    %v1792 = vadd.f32 0.0, %v1791
    %v1793 = vpop.f32.mrf.mxu0
    %v1794 = vadd.f32 0.0, %v1793
    %v1795 = vpop.f32.mrf.mxu0
    %v1796 = vadd.f32 0.0, %v1795
    %1797 = vmatprep.mubr.bf16.mxu0 0
    %1798 = vmatmul.mubr.bf16.gmra.mxu0 %v1653
    %v1799 = vpop.f32.mrf.mxu0
    %v1800 = vadd.f32 0.0, %v1799
    %v1801 = vpop.f32.mrf.mxu0
    %v1802 = vadd.f32 0.0, %v1801
    %v1803 = vpop.f32.mrf.mxu0
    %v1804 = vadd.f32 0.0, %v1803
    %v1805 = vpop.f32.mrf.mxu0
    %v1806 = vadd.f32 0.0, %v1805
    %1807 = vmatprep.mubr.bf16.mxu0 0
    %1808 = vmatmul.mubr.bf16.gmra.mxu0 %v1656
    %v1809 = vpop.f32.mrf.mxu0
    %v1810 = vadd.f32 0.0, %v1809
    %v1811 = vpop.f32.mrf.mxu0
    %v1812 = vadd.f32 0.0, %v1811
    %v1813 = vpop.f32.mrf.mxu0
    %v1814 = vpop.f32.mrf.mxu0
    %1815 = vdwg.mxu0
    %1816 = vmatprep.subr.bf16.mxu0 0
    %1817 = vmatpush1.bf16.msra.mxu0 0
    %1818 = vmatprep.subr.bf16.mxu0 %v1674
    %1819 = vmatpush1.bf16.msra.mxu0 %v1671
    %1820 = vmatprep.subr.bf16.mxu0 %v1558
    %1821 = vmatpush1.bf16.msra.mxu0 %v1557
    %1822 = vmatprep.subr.bf16.mxu0 %v1546
    %1823 = vmatpush1.bf16.msra.mxu0 %v1545
    %1824 = vmatprep.subr.bf16.mxu0 %v1534
    %1825 = vmatpush1.bf16.msra.mxu0 %v1533
    %1826 = vmatprep.subr.bf16.mxu0 %v1522
    %1827 = vmatpush1.bf16.msra.mxu0 %v1521
    %1828 = vmatprep.subr.bf16.mxu0 %v1510
    %1829 = vmatpush1.bf16.msra.mxu0 %v1509
    %1830 = vmatprep.subr.bf16.mxu0 %v1498
    %1831 = vmatpush1.bf16.msra.mxu0 %v1497
    %1832 = vmatprep.subr.bf16.mxu0 0
    %1833 = vmatpush2.bf16.msra.mxu0 0
    %1834 = vmatprep.subr.bf16.mxu0 0
    %1835 = vmatpush2.bf16.msra.mxu0 0
    %1836 = vmatprep.subr.bf16.mxu0 0
    %1837 = vmatpush2.bf16.msra.mxu0 0
    %1838 = vmatprep.subr.bf16.mxu0 0
    %1839 = vmatpush2.bf16.msra.mxu0 0
    %1840 = vmatprep.subr.bf16.mxu0 0
    %1841 = vmatpush2.bf16.msra.mxu0 0
    %1842 = vmatprep.subr.bf16.mxu0 0
    %1843 = vmatpush2.bf16.msra.mxu0 0
    %1844 = vmatprep.subr.bf16.mxu0 0
    %1845 = vmatpush2.bf16.msra.mxu0 0
    %1846 = vmatprep.subr.bf16.mxu0 0
    %1847 = vmatpush2.bf16.msra.mxu0 0
    %1848 = vmatprep.mubr.bf16.mxu0 0
    %1849 = vmatmul.mubr.bf16.gmra.mxu0 %v1650
    %v1850 = vpop.f32.mrf.mxu0
    %v1851 = vadd.f32 0.0, %v1850
    %v1852 = vpop.f32.mrf.mxu0
    %v1853 = vadd.f32 0.0, %v1852
    %v1854 = vpop.f32.mrf.mxu0
    %v1855 = vadd.f32 0.0, %v1854
    %v1856 = vpop.f32.mrf.mxu0
    %v1857 = vadd.f32 0.0, %v1856
    %1858 = vmatprep.mubr.bf16.mxu0 0
    %1859 = vmatmul.mubr.bf16.gmra.mxu0 %v1653
    %v1860 = vpop.f32.mrf.mxu0
    %v1861 = vadd.f32 0.0, %v1860
    %v1862 = vpop.f32.mrf.mxu0
    %v1863 = vadd.f32 0.0, %v1862
    %v1864 = vpop.f32.mrf.mxu0
    %v1865 = vadd.f32 0.0, %v1864
    %v1866 = vpop.f32.mrf.mxu0
    %v1867 = vadd.f32 0.0, %v1866
    %1868 = vmatprep.mubr.bf16.mxu0 0
    %1869 = vmatmul.mubr.bf16.gmra.mxu0 %v1656
    %v1870 = vpop.f32.mrf.mxu0
    %v1871 = vadd.f32 0.0, %v1870
    %v1872 = vpop.f32.mrf.mxu0
    %v1873 = vadd.f32 0.0, %v1872
    %v1874 = vpop.f32.mrf.mxu0
    %v1875 = vpop.f32.mrf.mxu0
    %1876 = vdwg.mxu0
    %1877 = vmatprep.subr.bf16.mxu0 0
    %1878 = vmatpush1.bf16.msra.mxu0 0
    %1879 = vmatprep.subr.bf16.mxu0 %v1680
    %1880 = vmatpush1.bf16.msra.mxu0 %v1677
    %1881 = vmatprep.subr.bf16.mxu0 %v1560
    %1882 = vmatpush1.bf16.msra.mxu0 %v1559
    %1883 = vmatprep.subr.bf16.mxu0 %v1548
    %1884 = vmatpush1.bf16.msra.mxu0 %v1547
    %1885 = vmatprep.subr.bf16.mxu0 %v1536
    %1886 = vmatpush1.bf16.msra.mxu0 %v1535
    %1887 = vmatprep.subr.bf16.mxu0 %v1524
    %1888 = vmatpush1.bf16.msra.mxu0 %v1523
    %1889 = vmatprep.subr.bf16.mxu0 %v1512
    %1890 = vmatpush1.bf16.msra.mxu0 %v1511
    %1891 = vmatprep.subr.bf16.mxu0 %v1500
    %1892 = vmatpush1.bf16.msra.mxu0 %v1499
    %1893 = vmatprep.subr.bf16.mxu0 0
    %1894 = vmatpush2.bf16.msra.mxu0 0
    %1895 = vmatprep.subr.bf16.mxu0 0
    %1896 = vmatpush2.bf16.msra.mxu0 0
    %1897 = vmatprep.subr.bf16.mxu0 0
    %1898 = vmatpush2.bf16.msra.mxu0 0
    %1899 = vmatprep.subr.bf16.mxu0 0
    %1900 = vmatpush2.bf16.msra.mxu0 0
    %1901 = vmatprep.subr.bf16.mxu0 0
    %1902 = vmatpush2.bf16.msra.mxu0 0
    %1903 = vmatprep.subr.bf16.mxu0 0
    %1904 = vmatpush2.bf16.msra.mxu0 0
    %1905 = vmatprep.subr.bf16.mxu0 0
    %1906 = vmatpush2.bf16.msra.mxu0 0
    %1907 = vmatprep.subr.bf16.mxu0 0
    %1908 = vmatpush2.bf16.msra.mxu0 0
    %1909 = vmatprep.mubr.bf16.mxu0 0
    %1910 = vmatmul.mubr.bf16.gmra.mxu0 %v1650
    %v1911 = vpop.f32.mrf.mxu0
    %v1912 = vadd.f32 0.0, %v1911
    %v1913 = vpop.f32.mrf.mxu0
    %v1914 = vadd.f32 0.0, %v1913
    %v1915 = vpop.f32.mrf.mxu0
    %v1916 = vadd.f32 0.0, %v1915
    %v1917 = vpop.f32.mrf.mxu0
    %v1918 = vadd.f32 0.0, %v1917
    %1919 = vmatprep.mubr.bf16.mxu0 0
    %1920 = vmatmul.mubr.bf16.gmra.mxu0 %v1653
    %v1921 = vpop.f32.mrf.mxu0
    %v1922 = vadd.f32 0.0, %v1921
    %v1923 = vpop.f32.mrf.mxu0
    %v1924 = vadd.f32 0.0, %v1923
    %v1925 = vpop.f32.mrf.mxu0
    %v1926 = vadd.f32 0.0, %v1925
    %v1927 = vpop.f32.mrf.mxu0
    %v1928 = vadd.f32 0.0, %v1927
    %1929 = vmatprep.mubr.bf16.mxu0 0
    %1930 = vmatmul.mubr.bf16.gmra.mxu0 %v1656
    %v1931 = vpop.f32.mrf.mxu0
    %v1932 = vadd.f32 0.0, %v1931
    %v1933 = vpop.f32.mrf.mxu0
    %v1934 = vadd.f32 0.0, %v1933
    %v1935 = vpop.f32.mrf.mxu0
    %v1936 = vpop.f32.mrf.mxu0
    %1937 = vdwg.mxu0
    %1938 = vmatprep.subr.bf16.mxu0 0
    %1939 = vmatpush1.bf16.msra.mxu0 0
    %1940 = vmatprep.subr.bf16.mxu0 %v1686
    %1941 = vmatpush1.bf16.msra.mxu0 %v1683
    %1942 = vmatprep.subr.bf16.mxu0 %v1562
    %1943 = vmatpush1.bf16.msra.mxu0 %v1561
    %1944 = vmatprep.subr.bf16.mxu0 %v1550
    %1945 = vmatpush1.bf16.msra.mxu0 %v1549
    %1946 = vmatprep.subr.bf16.mxu0 %v1538
    %1947 = vmatpush1.bf16.msra.mxu0 %v1537
    %1948 = vmatprep.subr.bf16.mxu0 %v1526
    %1949 = vmatpush1.bf16.msra.mxu0 %v1525
    %1950 = vmatprep.subr.bf16.mxu0 %v1514
    %1951 = vmatpush1.bf16.msra.mxu0 %v1513
    %1952 = vmatprep.subr.bf16.mxu0 %v1502
    %1953 = vmatpush1.bf16.msra.mxu0 %v1501
    %1954 = vmatprep.subr.bf16.mxu0 0
    %1955 = vmatpush2.bf16.msra.mxu0 0
    %1956 = vmatprep.subr.bf16.mxu0 0
    %1957 = vmatpush2.bf16.msra.mxu0 0
    %1958 = vmatprep.subr.bf16.mxu0 0
    %1959 = vmatpush2.bf16.msra.mxu0 0
    %1960 = vmatprep.subr.bf16.mxu0 0
    %1961 = vmatpush2.bf16.msra.mxu0 0
    %1962 = vmatprep.subr.bf16.mxu0 0
    %1963 = vmatpush2.bf16.msra.mxu0 0
    %1964 = vmatprep.subr.bf16.mxu0 0
    %1965 = vmatpush2.bf16.msra.mxu0 0
    %1966 = vmatprep.subr.bf16.mxu0 0
    %1967 = vmatpush2.bf16.msra.mxu0 0
    %1968 = vmatprep.subr.bf16.mxu0 0
    %1969 = vmatpush2.bf16.msra.mxu0 0
    %1970 = vmatprep.mubr.bf16.mxu0 0
    %1971 = vmatmul.mubr.bf16.gmra.mxu0 %v1650
    %v1972 = vpop.f32.mrf.mxu0
    %v1973 = vadd.f32 0.0, %v1972
    %v1974 = vpop.f32.mrf.mxu0
    %v1975 = vadd.f32 0.0, %v1974
    %v1976 = vpop.f32.mrf.mxu0
    %v1977 = vadd.f32 0.0, %v1976
    %v1978 = vpop.f32.mrf.mxu0
    %v1979 = vadd.f32 0.0, %v1978
    %1980 = vmatprep.mubr.bf16.mxu0 0
    %1981 = vmatmul.mubr.bf16.gmra.mxu0 %v1653
    %v1982 = vpop.f32.mrf.mxu0
    %v1983 = vadd.f32 0.0, %v1982
    %v1984 = vpop.f32.mrf.mxu0
    %v1985 = vadd.f32 0.0, %v1984
    %v1986 = vpop.f32.mrf.mxu0
    %v1987 = vadd.f32 0.0, %v1986
    %v1988 = vpop.f32.mrf.mxu0
    %v1989 = vadd.f32 0.0, %v1988
    %1990 = vmatprep.mubr.bf16.mxu0 0
    %1991 = vmatmul.mubr.bf16.gmra.mxu0 %v1656
    %v1992 = vpop.f32.mrf.mxu0
    %v1993 = vadd.f32 0.0, %v1992
    %v1994 = vpop.f32.mrf.mxu0
    %v1995 = vadd.f32 0.0, %v1994
    %v1996 = vpop.f32.mrf.mxu0
    %v1997 = vpop.f32.mrf.mxu0
    %1998 = vdwg.mxu0
    %1999 = vmatprep.subr.bf16.mxu0 0
    %2000 = vmatpush1.bf16.msra.mxu0 0
    %2001 = vmatprep.subr.bf16.mxu0 %v1692
    %2002 = vmatpush1.bf16.msra.mxu0 %v1689
    %2003 = vmatprep.subr.bf16.mxu0 %v1564
    %2004 = vmatpush1.bf16.msra.mxu0 %v1563
    %2005 = vmatprep.subr.bf16.mxu0 %v1552
    %2006 = vmatpush1.bf16.msra.mxu0 %v1551
    %2007 = vmatprep.subr.bf16.mxu0 %v1540
    %2008 = vmatpush1.bf16.msra.mxu0 %v1539
    %2009 = vmatprep.subr.bf16.mxu0 %v1528
    %2010 = vmatpush1.bf16.msra.mxu0 %v1527
    %2011 = vmatprep.subr.bf16.mxu0 %v1516
    %2012 = vmatpush1.bf16.msra.mxu0 %v1515
    %2013 = vmatprep.subr.bf16.mxu0 %v1504
    %2014 = vmatpush1.bf16.msra.mxu0 %v1503
    %2015 = vmatprep.subr.bf16.mxu0 0
    %2016 = vmatpush2.bf16.msra.mxu0 0
    %2017 = vmatprep.subr.bf16.mxu0 0
    %2018 = vmatpush2.bf16.msra.mxu0 0
    %2019 = vmatprep.subr.bf16.mxu0 0
    %2020 = vmatpush2.bf16.msra.mxu0 0
    %2021 = vmatprep.subr.bf16.mxu0 0
    %2022 = vmatpush2.bf16.msra.mxu0 0
    %2023 = vmatprep.subr.bf16.mxu0 0
    %2024 = vmatpush2.bf16.msra.mxu0 0
    %2025 = vmatprep.subr.bf16.mxu0 0
    %2026 = vmatpush2.bf16.msra.mxu0 0
    %2027 = vmatprep.subr.bf16.mxu0 0
    %2028 = vmatpush2.bf16.msra.mxu0 0
    %2029 = vmatprep.subr.bf16.mxu0 0
    %2030 = vmatpush2.bf16.msra.mxu0 0
    %2031 = vmatprep.mubr.bf16.mxu0 0
    %2032 = vmatmul.mubr.bf16.gmra.mxu0 %v1650
    %v2033 = vpop.f32.mrf.mxu0
    %v2034 = vadd.f32 0.0, %v2033
    %v2035 = vpop.f32.mrf.mxu0
    %v2036 = vadd.f32 0.0, %v2035
    %v2037 = vpop.f32.mrf.mxu0
    %v2038 = vadd.f32 0.0, %v2037
    %v2039 = vpop.f32.mrf.mxu0
    %v2040 = vadd.f32 0.0, %v2039
    %2041 = vmatprep.mubr.bf16.mxu0 0
    %2042 = vmatmul.mubr.bf16.gmra.mxu0 %v1653
    %v2043 = vpop.f32.mrf.mxu0
    %v2044 = vadd.f32 0.0, %v2043
    %v2045 = vpop.f32.mrf.mxu0
    %v2046 = vadd.f32 0.0, %v2045
    %v2047 = vpop.f32.mrf.mxu0
    %v2048 = vadd.f32 0.0, %v2047
    %v2049 = vpop.f32.mrf.mxu0
    %v2050 = vadd.f32 0.0, %v2049
    %2051 = vmatprep.mubr.bf16.mxu0 0
    %2052 = vmatmul.mubr.bf16.gmra.mxu0 %v1656
    %v2053 = vpop.f32.mrf.mxu0
    %v2054 = vadd.f32 0.0, %v2053
    %v2055 = vpop.f32.mrf.mxu0
    %v2056 = vadd.f32 0.0, %v2055
    %v2057 = vpop.f32.mrf.mxu0
    %v2058 = vpop.f32.mrf.mxu0
    %2059 = vdwg.mxu0
    %v2060 = vmax.f32 %v1729, %v1792
    %v2061 = vmax.f32 %v1731, %v1851
    %v2062 = vmax.f32 %v1790, %v1853
    %v2063 = vmax.f32 %v1733, %v1796
    %v2064 = vmax.f32 %v1735, %v1855
    %v2065 = vmax.f32 %v1794, %v1857
    %v2066 = vmax.f32 %v1739, %v1802
    %v2067 = vmax.f32 %v1741, %v1861
    %v2068 = vmax.f32 %v1800, %v1863
    %v2069 = vmax.f32 %v1743, %v1806
    %v2070 = vmax.f32 %v1745, %v1865
    %v2071 = vmax.f32 %v1804, %v1867
    %v2072 = vmax.f32 %v1749, %v1812
    %v2073 = vmax.f32 %v1751, %v1871
    %v2074 = vmax.f32 %v1810, %v1873
    %v2075 = vmax.f32 %v1912, %v1975
    %v2076 = vmax.f32 %v1914, %v2034
    %v2077 = vmax.f32 %v1973, %v2036
    %v2078 = vmax.f32 %v1916, %v1979
    %v2079 = vmax.f32 %v1918, %v2038
    %v2080 = vmax.f32 %v1977, %v2040
    %v2081 = vmax.f32 %v1922, %v1985
    %v2082 = vmax.f32 %v1924, %v2044
    %v2083 = vmax.f32 %v1983, %v2046
    %v2084 = vmax.f32 %v1926, %v1989
    %v2085 = vmax.f32 %v1928, %v2048
    %v2086 = vmax.f32 %v1987, %v2050
    %v2087 = vmax.f32 %v1932, %v1995
    %v2088 = vmax.f32 %v1934, %v2054
    %v2089 = vmax.f32 %v1993, %v2056
    %v2090 = vmax.f32 %v2060, %v2075
    %v2091 = vmax.f32 %v2061, %v2076
    %v2092 = vmax.f32 %v2062, %v2077
    %v2093 = vmax.f32 %v2063, %v2078
    %v2094 = vmax.f32 %v2064, %v2079
    %v2095 = vmax.f32 %v2065, %v2080
    %v2096 = vmax.f32 %v2066, %v2081
    %v2097 = vmax.f32 %v2067, %v2082
    %v2098 = vmax.f32 %v2068, %v2083
    %v2099 = vmax.f32 %v2069, %v2084
    %v2100 = vmax.f32 %v2070, %v2085
    %v2101 = vmax.f32 %v2071, %v2086
    %v2102 = vmax.f32 %v2072, %v2087
    %v2103 = vmax.f32 %v2073, %v2088
    %v2104 = vmax.f32 %v2074, %v2089
    %v2106 = vlaneseq
    %v2107 = vshrl.u32 %v2106, 7
    %v2108 = vsub.s32 0, %v2107
    %v2109 = vrot.slane %v1209, %v2108
    %v2110 = vlaneseq
    %v2111 = vshrl.u32 %v2110, 7
    %v2112 = vsub.s32 1, %v2111
    %v2113 = vrot.slane %v1209, %v2112
    %v2114 = vlaneseq
    %v2115 = vshrl.u32 %v2114, 7
    %v2116 = vsub.s32 2, %v2115
    %v2117 = vrot.slane %v1209, %v2116
    %v2121 = vadd.f32 %v2090, %v2109
    %v2122 = vadd.f32 %v2091, %v2113
    %v2123 = vadd.f32 %v2092, %v2117
    %v2124 = vadd.f32 %v2093, %v2109
    %v2125 = vadd.f32 %v2094, %v2113
    %v2126 = vadd.f32 %v2095, %v2117
    %v2127 = vadd.f32 %v2096, %v2109
    %v2128 = vadd.f32 %v2097, %v2113
    %v2129 = vadd.f32 %v2098, %v2117
    %v2130 = vadd.f32 %v2099, %v2109
    %v2131 = vadd.f32 %v2100, %v2113
    %v2132 = vadd.f32 %v2101, %v2117
    %v2133 = vadd.f32 %v2102, %v2109
    %v2134 = vadd.f32 %v2103, %v2113
    %v2135 = vadd.f32 %v2104, %v2117
    %v2136 = vmax.f32 %v2121, 0.0
    %v2137 = vmax.f32 %v2122, 0.0
    %v2138 = vmax.f32 %v2123, 0.0
    %v2139 = vmax.f32 %v2124, 0.0
    %v2140 = vmax.f32 %v2125, 0.0
    %v2141 = vmax.f32 %v2126, 0.0
    %v2142 = vmax.f32 %v2127, 0.0
    %v2143 = vmax.f32 %v2128, 0.0
    %v2144 = vmax.f32 %v2129, 0.0
    %v2145 = vmax.f32 %v2130, 0.0
    %v2146 = vmax.f32 %v2131, 0.0
    %v2147 = vmax.f32 %v2132, 0.0
    %v2148 = vmax.f32 %v2133, 0.0
    %v2149 = vmax.f32 %v2134, 0.0
    %v2150 = vmax.f32 %v2135, 0.0
    %v2151 = vpack.c.bf16 %v2139, %v2136
    %v2152 = vpack.c.bf16 %v2140, %v2137
    %v2153 = vpack.c.bf16 %v2141, %v2138
    %v2154 = vpack.c.bf16 %v2145, %v2142
    %v2155 = vpack.c.bf16 %v2146, %v2143
    %v2156 = vpack.c.bf16 %v2147, %v2144
    %v2157 = vpack.c.bf16 %v2148, %v2148
    %v2158 = vpack.c.bf16 %v2149, %v2149
    %v2159 = vpack.c.bf16 %v2150, %v2150
    %v2208 = vunpack.c.l.b16 %v1210
    %v2209 = vunpack.c.l.b16 %v1211
    %v2210 = vunpack.c.l.b16 %v1212
    %v2211 = vunpack.c.l.b16 %v1213
    %v2212 = vunpack.c.l.b16 %v1214
    %v2213 = vunpack.c.l.b16 %v1215
    %v2214 = vunpack.c.l.b16 %v1216
    %v2215 = vunpack.c.l.b16 %v1217
    %v2216 = vunpack.c.l.b16 %v1218
    %v2217 = vunpack.c.l.b16 %v1219
    %v2218 = vunpack.c.l.b16 %v1220
    %v2219 = vunpack.c.l.b16 %v1221
    %v2220 = vunpack.c.l.b16 %v1222
    %v2221 = vunpack.c.l.b16 %v1223
    %v2222 = vunpack.c.l.b16 %v1224
    %v2223 = vunpack.c.l.b16 %v1225
    %v2224 = vunpack.c.l.b16 %v1226
    %v2225 = vunpack.c.l.b16 %v1227
    %v2226 = vunpack.c.l.b16 %v1228
    %v2227 = vunpack.c.l.b16 %v1229
    %v2228 = vunpack.c.l.b16 %v1230
    %v2229 = vunpack.c.l.b16 %v1231
    %v2230 = vunpack.c.l.b16 %v1232
    %v2231 = vunpack.c.l.b16 %v1233
    %v2232 = vunpack.c.l.b16 %v1234
    %v2233 = vunpack.c.l.b16 %v1235
    %v2234 = vunpack.c.l.b16 %v1236
    %v2235 = vunpack.c.l.b16 %v1237
    %v2236 = vunpack.c.l.b16 %v1238
    %v2237 = vunpack.c.l.b16 %v1239
    %v2238 = vunpack.c.l.b16 %v1240
    %v2239 = vunpack.c.l.b16 %v1241
    %v2240 = vunpack.c.l.b16 %v1242
    %v2241 = vunpack.c.l.b16 %v1243
    %v2242 = vunpack.c.l.b16 %v1244
    %v2243 = vunpack.c.l.b16 %v1245
    %v2244 = vunpack.c.l.b16 %v1246
    %v2245 = vunpack.c.l.b16 %v1247
    %v2246 = vunpack.c.l.b16 %v1248
    %v2247 = vunpack.c.l.b16 %v1249
    %v2248 = vunpack.c.l.b16 %v1250
    %v2249 = vunpack.c.l.b16 %v1251
    %v2250 = vunpack.c.l.b16 %v1252
    %v2251 = vunpack.c.l.b16 %v1253
    %v2252 = vunpack.c.l.b16 %v1254
    %v2253 = vunpack.c.l.b16 %v1255
    %v2254 = vunpack.c.l.b16 %v1256
    %v2255 = vunpack.c.l.b16 %v1257
    %v2256 = vpack.c.b16 %v2209, %v2208
    %v2257 = vpack.c.b16 %v2211, %v2210
    %v2258 = vpack.c.b16 %v2213, %v2212
    %v2259 = vpack.c.b16 %v2215, %v2214
    %v2260 = vpack.c.b16 %v2217, %v2216
    %v2261 = vpack.c.b16 %v2219, %v2218
    %v2262 = vpack.c.b16 %v2221, %v2220
    %v2263 = vpack.c.b16 %v2223, %v2222
    %v2264 = vpack.c.b16 %v2225, %v2224
    %v2265 = vpack.c.b16 %v2227, %v2226
    %v2266 = vpack.c.b16 %v2229, %v2228
    %v2267 = vpack.c.b16 %v2231, %v2230
    %v2268 = vpack.c.b16 %v2233, %v2232
    %v2269 = vpack.c.b16 %v2235, %v2234
    %v2270 = vpack.c.b16 %v2237, %v2236
    %v2271 = vpack.c.b16 %v2239, %v2238
    %v2272 = vpack.c.b16 %v2241, %v2240
    %v2273 = vpack.c.b16 %v2243, %v2242
    %v2274 = vpack.c.b16 %v2245, %v2244
    %v2275 = vpack.c.b16 %v2247, %v2246
    %v2276 = vpack.c.b16 %v2249, %v2248
    %v2277 = vpack.c.b16 %v2251, %v2250
    %v2278 = vpack.c.b16 %v2253, %v2252
    %v2279 = vpack.c.b16 %v2255, %v2254
    %2304 = vmatprep.subr.bf16.mxu0 0
    %2305 = vmatpush1.bf16.msra.mxu0 %v2263
    %2306 = vmatprep.subr.bf16.mxu0 0
    %2307 = vmatpush1.bf16.msra.mxu0 %v2262
    %2308 = vmatprep.subr.bf16.mxu0 0
    %2309 = vmatpush1.bf16.msra.mxu0 %v2261
    %2310 = vmatprep.subr.bf16.mxu0 0
    %2311 = vmatpush1.bf16.msra.mxu0 %v2260
    %2312 = vmatprep.subr.bf16.mxu0 0
    %2313 = vmatpush1.bf16.msra.mxu0 %v2259
    %2314 = vmatprep.subr.bf16.mxu0 0
    %2315 = vmatpush1.bf16.msra.mxu0 %v2258
    %2316 = vmatprep.subr.bf16.mxu0 0
    %2317 = vmatpush1.bf16.msra.mxu0 %v2257
    %2318 = vmatprep.subr.bf16.mxu0 0
    %2319 = vmatpush1.bf16.msra.mxu0 %v2256
    %2320 = vmatprep.subr.bf16.mxu0 0
    %2321 = vmatpush2.bf16.msra.mxu0 %v2271
    %2322 = vmatprep.subr.bf16.mxu0 0
    %2323 = vmatpush2.bf16.msra.mxu0 %v2270
    %2324 = vmatprep.subr.bf16.mxu0 0
    %2325 = vmatpush2.bf16.msra.mxu0 %v2269
    %2326 = vmatprep.subr.bf16.mxu0 0
    %2327 = vmatpush2.bf16.msra.mxu0 %v2268
    %2328 = vmatprep.subr.bf16.mxu0 0
    %2329 = vmatpush2.bf16.msra.mxu0 %v2267
    %2330 = vmatprep.subr.bf16.mxu0 0
    %2331 = vmatpush2.bf16.msra.mxu0 %v2266
    %2332 = vmatprep.subr.bf16.mxu0 0
    %2333 = vmatpush2.bf16.msra.mxu0 %v2265
    %2334 = vmatprep.subr.bf16.mxu0 0
    %2335 = vmatpush2.bf16.msra.mxu0 %v2264
    %2336 = vmatprep.mubr.bf16.mxu0 %v2152
    %2337 = vmatmul.mubr.bf16.gmra.mxu0 %v2151
    %v2338 = vpop.f32.mrf.mxu0
    %v2339 = vadd.f32 0.0, %v2338
    %v2340 = vpop.f32.mrf.mxu0
    %v2341 = vpop.f32.mrf.mxu0
    %v2342 = vadd.f32 0.0, %v2341
    %v2343 = vpop.f32.mrf.mxu0
    %2344 = vmatprep.mubr.bf16.mxu0 %v2155
    %2345 = vmatmul.mubr.bf16.gmra.mxu0 %v2154
    %v2346 = vpop.f32.mrf.mxu0
    %v2347 = vadd.f32 0.0, %v2346
    %v2348 = vpop.f32.mrf.mxu0
    %v2349 = vpop.f32.mrf.mxu0
    %v2350 = vadd.f32 0.0, %v2349
    %v2351 = vpop.f32.mrf.mxu0
    %2352 = vmatprep.mubr.bf16.mxu0 %v2158
    %2353 = vmatmul.mubr.bf16.gmra.mxu0 %v2157
    %v2354 = vpop.f32.mrf.mxu0
    %v2355 = vadd.f32 0.0, %v2354
    %v2356 = vpop.f32.mrf.mxu0
    %v2357 = vpop.f32.mrf.mxu0
    %v2358 = vpop.f32.mrf.mxu0
    %2359 = vdwg.mxu0
    %2360 = vmatprep.subr.bf16.mxu0 0
    %2361 = vmatpush1.bf16.msra.mxu0 %v2279
    %2362 = vmatprep.subr.bf16.mxu0 0
    %2363 = vmatpush1.bf16.msra.mxu0 %v2278
    %2364 = vmatprep.subr.bf16.mxu0 0
    %2365 = vmatpush1.bf16.msra.mxu0 %v2277
    %2366 = vmatprep.subr.bf16.mxu0 0
    %2367 = vmatpush1.bf16.msra.mxu0 %v2276
    %2368 = vmatprep.subr.bf16.mxu0 0
    %2369 = vmatpush1.bf16.msra.mxu0 %v2275
    %2370 = vmatprep.subr.bf16.mxu0 0
    %2371 = vmatpush1.bf16.msra.mxu0 %v2274
    %2372 = vmatprep.subr.bf16.mxu0 0
    %2373 = vmatpush1.bf16.msra.mxu0 %v2273
    %2374 = vmatprep.subr.bf16.mxu0 0
    %2375 = vmatpush1.bf16.msra.mxu0 %v2272
    %2376 = vmatprep.subr.bf16.mxu0 0
    %2377 = vmatpush2.bf16.msra.mxu0 0
    %2378 = vmatprep.subr.bf16.mxu0 0
    %2379 = vmatpush2.bf16.msra.mxu0 0
    %2380 = vmatprep.subr.bf16.mxu0 0
    %2381 = vmatpush2.bf16.msra.mxu0 0
    %2382 = vmatprep.subr.bf16.mxu0 0
    %2383 = vmatpush2.bf16.msra.mxu0 0
    %2384 = vmatprep.subr.bf16.mxu0 0
    %2385 = vmatpush2.bf16.msra.mxu0 0
    %2386 = vmatprep.subr.bf16.mxu0 0
    %2387 = vmatpush2.bf16.msra.mxu0 0
    %2388 = vmatprep.subr.bf16.mxu0 0
    %2389 = vmatpush2.bf16.msra.mxu0 0
    %2390 = vmatprep.subr.bf16.mxu0 0
    %2391 = vmatpush2.bf16.msra.mxu0 0
    %2392 = vmatprep.mubr.bf16.mxu0 0
    %2393 = vmatmul.mubr.bf16.gmra.mxu0 %v2153
    %v2394 = vpop.f32.mrf.mxu0
    %v2395 = vadd.f32 %v2339, %v2394
    %v2396 = vpop.f32.mrf.mxu0
    %v2397 = vpop.f32.mrf.mxu0
    %v2398 = vadd.f32 %v2342, %v2397
    %v2399 = vpop.f32.mrf.mxu0
    %2400 = vmatprep.mubr.bf16.mxu0 0
    %2401 = vmatmul.mubr.bf16.gmra.mxu0 %v2156
    %v2402 = vpop.f32.mrf.mxu0
    %v2403 = vadd.f32 %v2347, %v2402
    %v2404 = vpop.f32.mrf.mxu0
    %v2405 = vpop.f32.mrf.mxu0
    %v2406 = vadd.f32 %v2350, %v2405
    %v2407 = vpop.f32.mrf.mxu0
    %2408 = vmatprep.mubr.bf16.mxu0 0
    %2409 = vmatmul.mubr.bf16.gmra.mxu0 %v2159
    %v2410 = vpop.f32.mrf.mxu0
    %v2411 = vadd.f32 %v2355, %v2410
    %v2412 = vpop.f32.mrf.mxu0
    %v2413 = vpop.f32.mrf.mxu0
    %v2414 = vpop.f32.mrf.mxu0
    %2415 = vdwg.mxu0
    %2421 = vrot.lane.b32.xlu0 %v2395, 96
    %v2422 = vpop.permute.xlu0 %2421
    %2423 = vrot.lane.b32.xlu0 %v2398, 96
    %v2424 = vpop.permute.xlu0 %2423
    %2425 = vrot.lane.b32.xlu0 %v2403, 96
    %v2426 = vpop.permute.xlu0 %2425
    %2427 = vrot.lane.b32.xlu0 %v2406, 96
    %v2428 = vpop.permute.xlu0 %2427
    %2429 = vrot.lane.b32.xlu0 %v2411, 96
    %v2430 = vpop.permute.xlu0 %2429
    %v2436 = vmax.f32 %v2395, %v2422
    %v2437 = vmax.f32 %v2398, %v2424
    %v2438 = vmax.f32 %v2403, %v2426
    %v2439 = vmax.f32 %v2406, %v2428
    %v2440 = vmax.f32 %v2411, %v2430
    %2446 = vrot.lane.b32.xlu0 %v2436, 64
    %v2447 = vpop.permute.xlu0 %2446
    %2448 = vrot.lane.b32.xlu0 %v2437, 64
    %v2449 = vpop.permute.xlu0 %2448
    %2450 = vrot.lane.b32.xlu0 %v2438, 64
    %v2451 = vpop.permute.xlu0 %2450
    %2452 = vrot.lane.b32.xlu0 %v2439, 64
    %v2453 = vpop.permute.xlu0 %2452
    %2454 = vrot.lane.b32.xlu0 %v2440, 64
    %v2455 = vpop.permute.xlu0 %2454
    %v2461 = vmax.f32 %v2436, %v2447
    %v2462 = vmax.f32 %v2437, %v2449
    %v2463 = vmax.f32 %v2438, %v2451
    %v2464 = vmax.f32 %v2439, %v2453
    %v2465 = vmax.f32 %v2440, %v2455
    %v2466 = vadd.f32 %v2461, %v1258
    %v2467 = vadd.f32 %v2462, %v1258
    %v2468 = vadd.f32 %v2463, %v1258
    %v2469 = vadd.f32 %v2464, %v1258
    %v2470 = vadd.f32 %v2465, %v1258
    %v2471 = vmax.f32 %v2466, 0.0
    %v2472 = vmax.f32 %v2467, 0.0
    %v2473 = vmax.f32 %v2468, 0.0
    %v2474 = vmax.f32 %v2469, 0.0
    %v2475 = vmax.f32 %v2470, 0.0
    %v2476 = vlaneseq
    %v2477 = vshrl.u32 %v2476, 7
    %v2478 = vlaneseq
    %v2479 = vand.u32 %v2478, 127
    %v2480 = vmul.u32 %v2477, 20
    %vm2481 = vcmp.ge.s32.totalorder %v2479, %v2480
    %v2482 = vadd.s32 %v2477, 1
    %v2483 = vmul.u32 %v2482, 20
    %vm2484 = vcmp.lt.s32.totalorder %v2479, %v2483
    %vm2485 = vmand %vm2481, %vm2484
    %v2486 = vsel %vm2485, 1.0, 0.0
    %vm2487 = vcmask 326656
    %v2489 = vsel %vm2487, %v2486, 0
    %2491 = vmatprep.subr.mxu0 0.0
    %2492 = vmatpush1.msra.mxu0 0.0
    %2493 = vmatprep.subr.mxu0 0.0
    %2494 = vmatpush1.msra.mxu0 0.0
    %2495 = vmatprep.subr.mxu0 0.0
    %2496 = vmatpush1.msra.mxu0 0.0
    %2497 = vmatprep.subr.mxu0 0.0
    %2498 = vmatpush1.msra.mxu0 0.0
    %2499 = vmatprep.subr.mxu0 0.0
    %2500 = vmatpush1.msra.mxu0 0.0
    %2501 = vmatprep.subr.mxu0 0.0
    %2502 = vmatpush1.msra.mxu0 0.0
    %2503 = vmatprep.subr.mxu0 0.0
    %2504 = vmatpush1.msra.mxu0 0.0
    %2505 = vmatprep.subr.mxu0 0.0
    %2506 = vmatpush1.msra.mxu0 0.0
    %2507 = vmatprep.subr.mxu0 0.0
    %2508 = vmatpush1.msra.mxu0 0.0
    %2509 = vmatprep.subr.mxu0 0.0
    %2510 = vmatpush1.msra.mxu0 0.0
    %2511 = vmatprep.subr.mxu0 0.0
    %2512 = vmatpush1.msra.mxu0 0.0
    %2513 = vmatprep.subr.mxu0 0.0
    %2514 = vmatpush1.msra.mxu0 %v2475
    %2515 = vmatprep.subr.mxu0 0.0
    %2516 = vmatpush1.msra.mxu0 %v2474
    %2517 = vmatprep.subr.mxu0 0.0
    %2518 = vmatpush1.msra.mxu0 %v2473
    %2519 = vmatprep.subr.mxu0 0.0
    %2520 = vmatpush1.msra.mxu0 %v2472
    %2521 = vmatprep.subr.mxu0 0.0
    %2522 = vmatpush1.msra.mxu0 %v2471
    %2523 = vmatprep.subr.mxu0 0.0
    %2524 = vmatpush2.msra.mxu0 0.0
    %2525 = vmatprep.subr.mxu0 0.0
    %2526 = vmatpush2.msra.mxu0 0.0
    %2527 = vmatprep.subr.mxu0 0.0
    %2528 = vmatpush2.msra.mxu0 0.0
    %2529 = vmatprep.subr.mxu0 0.0
    %2530 = vmatpush2.msra.mxu0 0.0
    %2531 = vmatprep.subr.mxu0 0.0
    %2532 = vmatpush2.msra.mxu0 0.0
    %2533 = vmatprep.subr.mxu0 0.0
    %2534 = vmatpush2.msra.mxu0 0.0
    %2535 = vmatprep.subr.mxu0 0.0
    %2536 = vmatpush2.msra.mxu0 0.0
    %2537 = vmatprep.subr.mxu0 0.0
    %2538 = vmatpush2.msra.mxu0 0.0
    %2539 = vmatprep.subr.mxu0 0.0
    %2540 = vmatpush2.msra.mxu0 0.0
    %2541 = vmatprep.subr.mxu0 0.0
    %2542 = vmatpush2.msra.mxu0 0.0
    %2543 = vmatprep.subr.mxu0 0.0
    %2544 = vmatpush2.msra.mxu0 0.0
    %2545 = vmatprep.subr.mxu0 0.0
    %2546 = vmatpush2.msra.mxu0 0.0
    %2547 = vmatprep.subr.mxu0 0.0
    %2548 = vmatpush2.msra.mxu0 0.0
    %2549 = vmatprep.subr.mxu0 0.0
    %2550 = vmatpush2.msra.mxu0 0.0
    %2551 = vmatprep.subr.mxu0 0.0
    %2552 = vmatpush2.msra.mxu0 0.0
    %2553 = vmatprep.subr.mxu0 0.0
    %2554 = vmatpush2.msra.mxu0 0.0
    %2555 = vmatprep.mubr.f32.mxu0 0.0
    %2556 = vmatmul.mubr.f32.gmra.mxu0 %v2489
    %v2557 = vpop.f32.mrf.mxu0
    %v2558 = vadd.f32 0.0, %v2557
    %v2559 = vpop.f32.mrf.mxu0
    %2560 = vdwg.mxu0
    %2562 = vrot.lane.b32.xlu0 %v1121, 32
    %v2563 = vpop.permute.xlu0 %2562
    %vm2565 = vcmask 261120
    %v2566 = vsel %vm2565, %v2558, %v2563
    %v2567 = vpack.c.bf16 %v2566, %v2566
    %v2568 = vld [vmem:[%s4] sm:$0xff]
    %v2569 = vld [vmem:[%s4 + $0x8] sm:$0xff]
    %v2570 = vld [vmem:[%s4 + $0x10] sm:$0xff]
    %v2571 = vld [vmem:[%s4 + $0x18] sm:$0xff]
    %v2572 = vld [vmem:[%s4 + $0x20] sm:$0xff]
    %v2573 = vld [vmem:[%s4 + $0x28] sm:$0xff]
    %v2574 = vld [vmem:[%s4 + $0x30] sm:$0xff]
    %v2575 = vld [vmem:[%s4 + $0x38] sm:$0xff]
    %s2576 = scalar_lea.vmem %s7, 2
    %v2577 = vld [vmem:[%s2576] ss:$8 sm:$0x3]
    %v2579 = vlaneseq
    %v2580 = vshrl.u32 %v2579, 7
    %v2581 = vsub.s32 0, %v2580
    %v2582 = vrot.slane %v2577, %v2581
    %v2583 = vlaneseq
    %v2584 = vshrl.u32 %v2583, 7
    %v2585 = vsub.s32 1, %v2584
    %v2586 = vrot.slane %v2577, %v2585
    %v2597 = vunpack.c.l.b16 %v2568
    %v2598 = vunpack.c.h.b16 %v2568
    %v2599 = vunpack.c.l.b16 %v2569
    %v2600 = vunpack.c.h.b16 %v2569
    %v2601 = vunpack.c.l.b16 %v2570
    %v2602 = vunpack.c.h.b16 %v2570
    %v2603 = vunpack.c.l.b16 %v2571
    %v2604 = vunpack.c.h.b16 %v2571
    %v2605 = vunpack.c.l.b16 %v2572
    %v2606 = vunpack.c.h.b16 %v2572
    %v2607 = vunpack.c.l.b16 %v2573
    %v2608 = vunpack.c.h.b16 %v2573
    %v2609 = vunpack.c.l.b16 %v2574
    %v2610 = vunpack.c.h.b16 %v2574
    %v2611 = vunpack.c.l.b16 %v2575
    %v2612 = vunpack.c.h.b16 %v2575
    %v2613 = vpack.c.b16 %v2599, %v2597
    %v2614 = vpack.c.b16 %v2600, %v2598
    %v2615 = vpack.c.b16 %v2603, %v2601
    %v2616 = vpack.c.b16 %v2604, %v2602
    %v2617 = vpack.c.b16 %v2607, %v2605
    %v2618 = vpack.c.b16 %v2608, %v2606
    %v2619 = vpack.c.b16 %v2611, %v2609
    %v2620 = vpack.c.b16 %v2612, %v2610
    %vm2629 = vcmask 523264
    %v2631 = vsel %vm2629, %v2567, 0
    %2633 = vmatprep.subr.bf16.mxu0 0
    %2634 = vmatpush1.bf16.msra.mxu0 0
    %2635 = vmatprep.subr.bf16.mxu0 0
    %2636 = vmatpush1.bf16.msra.mxu0 0
    %2637 = vmatprep.subr.bf16.mxu0 0
    %2638 = vmatpush1.bf16.msra.mxu0 0
    %2639 = vmatprep.subr.bf16.mxu0 0
    %2640 = vmatpush1.bf16.msra.mxu0 0
    %2641 = vmatprep.subr.bf16.mxu0 %v2620
    %2642 = vmatpush1.bf16.msra.mxu0 %v2619
    %2643 = vmatprep.subr.bf16.mxu0 %v2618
    %2644 = vmatpush1.bf16.msra.mxu0 %v2617
    %2645 = vmatprep.subr.bf16.mxu0 %v2616
    %2646 = vmatpush1.bf16.msra.mxu0 %v2615
    %2647 = vmatprep.subr.bf16.mxu0 %v2614
    %2648 = vmatpush1.bf16.msra.mxu0 %v2613
    %2649 = vmatprep.subr.bf16.mxu0 0
    %2650 = vmatpush2.bf16.msra.mxu0 0
    %2651 = vmatprep.subr.bf16.mxu0 0
    %2652 = vmatpush2.bf16.msra.mxu0 0
    %2653 = vmatprep.subr.bf16.mxu0 0
    %2654 = vmatpush2.bf16.msra.mxu0 0
    %2655 = vmatprep.subr.bf16.mxu0 0
    %2656 = vmatpush2.bf16.msra.mxu0 0
    %2657 = vmatprep.subr.bf16.mxu0 0
    %2658 = vmatpush2.bf16.msra.mxu0 0
    %2659 = vmatprep.subr.bf16.mxu0 0
    %2660 = vmatpush2.bf16.msra.mxu0 0
    %2661 = vmatprep.subr.bf16.mxu0 0
    %2662 = vmatpush2.bf16.msra.mxu0 0
    %2663 = vmatprep.subr.bf16.mxu0 0
    %2664 = vmatpush2.bf16.msra.mxu0 0
    %2665 = vmatprep.mubr.bf16.mxu0 0
    %2666 = vmatmul.mubr.bf16.gmra.mxu0 %v2631
    %v2667 = vpop.f32.mrf.mxu0
    %v2668 = vadd.f32 %v2582, %v2667
    %v2669 = vpop.f32.mrf.mxu0
    %v2670 = vadd.f32 %v2586, %v2669
    %v2671 = vpop.f32.mrf.mxu0
    %v2672 = vpop.f32.mrf.mxu0
    %2673 = vdwg.mxu0
    %v2674 = vmax.f32 %v2668, 0.0
    %v2675 = vmax.f32 %v2670, 0.0
    %v2676 = vpack.c.bf16 %v2674, %v2674
    %v2677 = vpack.c.bf16 %v2675, %v2675
    %v2678 = vld [vmem:[%s5] sm:$0xff]
    %v2679 = vld [vmem:[%s5 + $0x8] sm:$0xff]
    %v2680 = vld [vmem:[%s5 + $0x10] sm:$0xff]
    %v2681 = vld [vmem:[%s5 + $0x18] sm:$0xff]
    %v2682 = vld [vmem:[%s5 + $0x20] sm:$0xff]
    %v2683 = vld [vmem:[%s5 + $0x28] sm:$0xff]
    %v2684 = vld [vmem:[%s5 + $0x30] sm:$0xff]
    %v2685 = vld [vmem:[%s5 + $0x38] sm:$0xff]
    %v2686 = vld [vmem:[%s5 + $0x40] sm:$0xff]
    %v2687 = vld [vmem:[%s5 + $0x48] sm:$0xff]
    %v2688 = vld [vmem:[%s5 + $0x50] sm:$0xff]
    %v2689 = vld [vmem:[%s5 + $0x58] sm:$0xff]
    %v2690 = vld [vmem:[%s5 + $0x60] sm:$0xff]
    %v2691 = vld [vmem:[%s5 + $0x68] sm:$0xff]
    %v2692 = vld [vmem:[%s5 + $0x70] sm:$0xff]
    %v2693 = vld [vmem:[%s5 + $0x78] sm:$0xff]
    %v2694 = vld [vmem:[%s5 + $0x80] sm:$0xff]
    %v2695 = vld [vmem:[%s5 + $0x88] sm:$0xff]
    %v2696 = vld [vmem:[%s5 + $0x90] sm:$0xff]
    %v2697 = vld [vmem:[%s5 + $0x98] sm:$0xff]
    %v2698 = vld [vmem:[%s5 + $0xa0] sm:$0xff]
    %v2699 = vld [vmem:[%s5 + $0xa8] sm:$0xff]
    %v2700 = vld [vmem:[%s5 + $0xb0] sm:$0xff]
    %v2701 = vld [vmem:[%s5 + $0xb8] sm:$0xff]
    %v2702 = vld [vmem:[%s5 + $0xc0] sm:$0xff]
    %s2703 = scalar_lea.vmem %s7, 3
    %v2704 = vld [vmem:[%s2703] ss:$8 sm:$0x3]
    %v2706 = vlaneseq
    %v2707 = vshrl.u32 %v2706, 7
    %v2708 = vsub.s32 0, %v2707
    %v2709 = vrot.slane %v2704, %v2708
    %v2710 = vlaneseq
    %v2711 = vshrl.u32 %v2710, 7
    %v2712 = vsub.s32 1, %v2711
    %v2713 = vrot.slane %v2704, %v2712
    %v2741 = vunpack.c.l.b16 %v2678
    %v2742 = vunpack.c.h.b16 %v2678
    %v2743 = vunpack.c.l.b16 %v2679
    %v2744 = vunpack.c.h.b16 %v2679
    %v2745 = vunpack.c.l.b16 %v2680
    %v2746 = vunpack.c.h.b16 %v2680
    %v2747 = vunpack.c.l.b16 %v2681
    %v2748 = vunpack.c.h.b16 %v2681
    %v2749 = vunpack.c.l.b16 %v2682
    %v2750 = vunpack.c.h.b16 %v2682
    %v2751 = vunpack.c.l.b16 %v2683
    %v2752 = vunpack.c.h.b16 %v2683
    %v2753 = vunpack.c.l.b16 %v2684
    %v2754 = vunpack.c.h.b16 %v2684
    %v2755 = vunpack.c.l.b16 %v2685
    %v2756 = vunpack.c.h.b16 %v2685
    %v2757 = vunpack.c.l.b16 %v2686
    %v2758 = vunpack.c.h.b16 %v2686
    %v2759 = vunpack.c.l.b16 %v2687
    %v2760 = vunpack.c.h.b16 %v2687
    %v2761 = vunpack.c.l.b16 %v2688
    %v2762 = vunpack.c.h.b16 %v2688
    %v2763 = vunpack.c.l.b16 %v2689
    %v2764 = vunpack.c.h.b16 %v2689
    %v2765 = vunpack.c.l.b16 %v2690
    %v2766 = vunpack.c.h.b16 %v2690
    %v2767 = vunpack.c.l.b16 %v2691
    %v2768 = vunpack.c.h.b16 %v2691
    %v2769 = vunpack.c.l.b16 %v2692
    %v2770 = vunpack.c.h.b16 %v2692
    %v2771 = vunpack.c.l.b16 %v2693
    %v2772 = vunpack.c.h.b16 %v2693
    %v2773 = vunpack.c.l.b16 %v2694
    %v2774 = vunpack.c.h.b16 %v2694
    %v2775 = vunpack.c.l.b16 %v2695
    %v2776 = vunpack.c.h.b16 %v2695
    %v2777 = vunpack.c.l.b16 %v2696
    %v2778 = vunpack.c.h.b16 %v2696
    %v2779 = vunpack.c.l.b16 %v2697
    %v2780 = vunpack.c.h.b16 %v2697
    %v2781 = vunpack.c.l.b16 %v2698
    %v2782 = vunpack.c.h.b16 %v2698
    %v2783 = vunpack.c.l.b16 %v2699
    %v2784 = vunpack.c.h.b16 %v2699
    %v2785 = vunpack.c.l.b16 %v2700
    %v2786 = vunpack.c.h.b16 %v2700
    %v2787 = vunpack.c.l.b16 %v2701
    %v2788 = vunpack.c.h.b16 %v2701
    %v2789 = vunpack.c.l.b16 %v2702
    %v2790 = vunpack.c.h.b16 %v2702
    %v2791 = vpack.c.b16 %v2743, %v2741
    %v2792 = vpack.c.b16 %v2744, %v2742
    %v2793 = vpack.c.b16 %v2747, %v2745
    %v2794 = vpack.c.b16 %v2748, %v2746
    %v2795 = vpack.c.b16 %v2751, %v2749
    %v2796 = vpack.c.b16 %v2752, %v2750
    %v2797 = vpack.c.b16 %v2755, %v2753
    %v2798 = vpack.c.b16 %v2756, %v2754
    %v2799 = vpack.c.b16 %v2759, %v2757
    %v2800 = vpack.c.b16 %v2760, %v2758
    %v2801 = vpack.c.b16 %v2763, %v2761
    %v2802 = vpack.c.b16 %v2764, %v2762
    %v2803 = vpack.c.b16 %v2767, %v2765
    %v2804 = vpack.c.b16 %v2768, %v2766
    %v2805 = vpack.c.b16 %v2771, %v2769
    %v2806 = vpack.c.b16 %v2772, %v2770
    %v2807 = vpack.c.b16 %v2775, %v2773
    %v2808 = vpack.c.b16 %v2776, %v2774
    %v2809 = vpack.c.b16 %v2779, %v2777
    %v2810 = vpack.c.b16 %v2780, %v2778
    %v2811 = vpack.c.b16 %v2783, %v2781
    %v2812 = vpack.c.b16 %v2784, %v2782
    %v2813 = vpack.c.b16 %v2787, %v2785
    %v2814 = vpack.c.b16 %v2788, %v2786
    %v2815 = vpack.c.b16 %v2789, %v2789
    %v2816 = vpack.c.b16 %v2790, %v2790
    %vm2841 = vcmask 588800
    %v2843 = vsel %vm2841, %v2677, 0
    %vm2845 = vcmask 1043456
    %v2847 = vsel %vm2845, %v2815, 0
    %v2850 = vsel %vm2845, %v2816, 0
    %2852 = vmatprep.subr.bf16.mxu0 %v2806
    %2853 = vmatpush1.bf16.msra.mxu0 %v2805
    %2854 = vmatprep.subr.bf16.mxu0 %v2804
    %2855 = vmatpush1.bf16.msra.mxu0 %v2803
    %2856 = vmatprep.subr.bf16.mxu0 %v2802
    %2857 = vmatpush1.bf16.msra.mxu0 %v2801
    %2858 = vmatprep.subr.bf16.mxu0 %v2800
    %2859 = vmatpush1.bf16.msra.mxu0 %v2799
    %2860 = vmatprep.subr.bf16.mxu0 %v2798
    %2861 = vmatpush1.bf16.msra.mxu0 %v2797
    %2862 = vmatprep.subr.bf16.mxu0 %v2796
    %2863 = vmatpush1.bf16.msra.mxu0 %v2795
    %2864 = vmatprep.subr.bf16.mxu0 %v2794
    %2865 = vmatpush1.bf16.msra.mxu0 %v2793
    %2866 = vmatprep.subr.bf16.mxu0 %v2792
    %2867 = vmatpush1.bf16.msra.mxu0 %v2791
    %2868 = vmatprep.subr.bf16.mxu0 0
    %2869 = vmatpush2.bf16.msra.mxu0 0
    %2870 = vmatprep.subr.bf16.mxu0 0
    %2871 = vmatpush2.bf16.msra.mxu0 0
    %2872 = vmatprep.subr.bf16.mxu0 0
    %2873 = vmatpush2.bf16.msra.mxu0 0
    %2874 = vmatprep.subr.bf16.mxu0 %v2850
    %2875 = vmatpush2.bf16.msra.mxu0 %v2847
    %2876 = vmatprep.subr.bf16.mxu0 %v2814
    %2877 = vmatpush2.bf16.msra.mxu0 %v2813
    %2878 = vmatprep.subr.bf16.mxu0 %v2812
    %2879 = vmatpush2.bf16.msra.mxu0 %v2811
    %2880 = vmatprep.subr.bf16.mxu0 %v2810
    %2881 = vmatpush2.bf16.msra.mxu0 %v2809
    %2882 = vmatprep.subr.bf16.mxu0 %v2808
    %2883 = vmatpush2.bf16.msra.mxu0 %v2807
    %2884 = vmatprep.mubr.bf16.mxu0 %v2843
    %2885 = vmatmul.mubr.bf16.gmra.mxu0 %v2676
    %v2886 = vpop.f32.mrf.mxu0
    %v2887 = vadd.f32 %v2709, %v2886
    %v2888 = vpop.f32.mrf.mxu0
    %v2889 = vadd.f32 %v2713, %v2888
    %v2890 = vpop.f32.mrf.mxu0
    %v2891 = vpop.f32.mrf.mxu0
    %2892 = vdwg.mxu0
    %v2893 = vmax.f32 %v2887, 0.0
    %v2894 = vmax.f32 %v2889, 0.0
    %v2895 = vpack.c.bf16 %v2893, %v2893
    %v2896 = vpack.c.bf16 %v2894, %v2894
    %v2897 = vld [vmem:[%s6] sm:$0xf]
    %v2898 = vld [vmem:[%s6 + $0x4] sm:$0xf]
    %v2899 = vld [vmem:[%s6 + $0x8] sm:$0xf]
    %v2900 = vld [vmem:[%s6 + $0xc] sm:$0xf]
    %v2901 = vld [vmem:[%s6 + $0x10] sm:$0xf]
    %v2902 = vld [vmem:[%s6 + $0x14] sm:$0xf]
    %v2903 = vld [vmem:[%s6 + $0x18] sm:$0xf]
    %v2904 = vld [vmem:[%s6 + $0x1c] sm:$0xf]
    %v2905 = vld [vmem:[%s6 + $0x20] sm:$0xf]
    %v2906 = vld [vmem:[%s6 + $0x24] sm:$0xf]
    %v2907 = vld [vmem:[%s6 + $0x28] sm:$0xf]
    %v2908 = vld [vmem:[%s6 + $0x2c] sm:$0xf]
    %v2909 = vld [vmem:[%s6 + $0x30] sm:$0xf]
    %v2910 = vld [vmem:[%s6 + $0x34] sm:$0xf]
    %v2911 = vld [vmem:[%s6 + $0x38] sm:$0xf]
    %v2912 = vld [vmem:[%s6 + $0x3c] sm:$0xf]
    %v2913 = vld [vmem:[%s6 + $0x40] sm:$0xf]
    %v2914 = vld [vmem:[%s6 + $0x44] sm:$0xf]
    %v2915 = vld [vmem:[%s6 + $0x48] sm:$0xf]
    %v2916 = vld [vmem:[%s6 + $0x4c] sm:$0xf]
    %v2917 = vld [vmem:[%s6 + $0x50] sm:$0xf]
    %v2918 = vld [vmem:[%s6 + $0x54] sm:$0xf]
    %v2919 = vld [vmem:[%s6 + $0x58] sm:$0xf]
    %v2920 = vld [vmem:[%s6 + $0x5c] sm:$0xf]
    %v2921 = vld [vmem:[%s6 + $0x60] sm:$0xf]
    %v2922 = vld [vmem:[%s7 + $0x4] ss:$0 sm:$0xff]
    %v2948 = vunpack.c.l.b16 %v2897
    %v2949 = vunpack.c.l.b16 %v2898
    %v2950 = vunpack.c.l.b16 %v2899
    %v2951 = vunpack.c.l.b16 %v2900
    %v2952 = vunpack.c.l.b16 %v2901
    %v2953 = vunpack.c.l.b16 %v2902
    %v2954 = vunpack.c.l.b16 %v2903
    %v2955 = vunpack.c.l.b16 %v2904
    %v2956 = vunpack.c.l.b16 %v2905
    %v2957 = vunpack.c.l.b16 %v2906
    %v2958 = vunpack.c.l.b16 %v2907
    %v2959 = vunpack.c.l.b16 %v2908
    %v2960 = vunpack.c.l.b16 %v2909
    %v2961 = vunpack.c.l.b16 %v2910
    %v2962 = vunpack.c.l.b16 %v2911
    %v2963 = vunpack.c.l.b16 %v2912
    %v2964 = vunpack.c.l.b16 %v2913
    %v2965 = vunpack.c.l.b16 %v2914
    %v2966 = vunpack.c.l.b16 %v2915
    %v2967 = vunpack.c.l.b16 %v2916
    %v2968 = vunpack.c.l.b16 %v2917
    %v2969 = vunpack.c.l.b16 %v2918
    %v2970 = vunpack.c.l.b16 %v2919
    %v2971 = vunpack.c.l.b16 %v2920
    %v2972 = vunpack.c.l.b16 %v2921
    %v2973 = vpack.c.b16 %v2949, %v2948
    %v2974 = vpack.c.b16 %v2951, %v2950
    %v2975 = vpack.c.b16 %v2953, %v2952
    %v2976 = vpack.c.b16 %v2955, %v2954
    %v2977 = vpack.c.b16 %v2957, %v2956
    %v2978 = vpack.c.b16 %v2959, %v2958
    %v2979 = vpack.c.b16 %v2961, %v2960
    %v2980 = vpack.c.b16 %v2963, %v2962
    %v2981 = vpack.c.b16 %v2965, %v2964
    %v2982 = vpack.c.b16 %v2967, %v2966
    %v2983 = vpack.c.b16 %v2969, %v2968
    %v2984 = vpack.c.b16 %v2971, %v2970
    %v2985 = vpack.c.b16 %v2972, %v2972
    %v2999 = vsel %vm2841, %v2896, 0
    %v3002 = vsel %vm2845, %v2985, 0
    %3004 = vmatprep.subr.bf16.mxu0 0
    %3005 = vmatpush1.bf16.msra.mxu0 %v2980
    %3006 = vmatprep.subr.bf16.mxu0 0
    %3007 = vmatpush1.bf16.msra.mxu0 %v2979
    %3008 = vmatprep.subr.bf16.mxu0 0
    %3009 = vmatpush1.bf16.msra.mxu0 %v2978
    %3010 = vmatprep.subr.bf16.mxu0 0
    %3011 = vmatpush1.bf16.msra.mxu0 %v2977
    %3012 = vmatprep.subr.bf16.mxu0 0
    %3013 = vmatpush1.bf16.msra.mxu0 %v2976
    %3014 = vmatprep.subr.bf16.mxu0 0
    %3015 = vmatpush1.bf16.msra.mxu0 %v2975
    %3016 = vmatprep.subr.bf16.mxu0 0
    %3017 = vmatpush1.bf16.msra.mxu0 %v2974
    %3018 = vmatprep.subr.bf16.mxu0 0
    %3019 = vmatpush1.bf16.msra.mxu0 %v2973
    %3020 = vmatprep.subr.bf16.mxu0 0
    %3021 = vmatpush2.bf16.msra.mxu0 0
    %3022 = vmatprep.subr.bf16.mxu0 0
    %3023 = vmatpush2.bf16.msra.mxu0 0
    %3024 = vmatprep.subr.bf16.mxu0 0
    %3025 = vmatpush2.bf16.msra.mxu0 0
    %3026 = vmatprep.subr.bf16.mxu0 0
    %3027 = vmatpush2.bf16.msra.mxu0 %v3002
    %3028 = vmatprep.subr.bf16.mxu0 0
    %3029 = vmatpush2.bf16.msra.mxu0 %v2984
    %3030 = vmatprep.subr.bf16.mxu0 0
    %3031 = vmatpush2.bf16.msra.mxu0 %v2983
    %3032 = vmatprep.subr.bf16.mxu0 0
    %3033 = vmatpush2.bf16.msra.mxu0 %v2982
    %3034 = vmatprep.subr.bf16.mxu0 0
    %3035 = vmatpush2.bf16.msra.mxu0 %v2981
    %3036 = vmatprep.mubr.bf16.mxu0 %v2999
    %3037 = vmatmul.mubr.bf16.gmra.mxu0 %v2895
    %v3038 = vpop.f32.mrf.mxu0
    %v3039 = vadd.f32 %v2922, %v3038
    %v3040 = vpop.f32.mrf.mxu0
    %v3041 = vpop.f32.mrf.mxu0
    %v3042 = vpop.f32.mrf.mxu0
    %3043 = vdwg.mxu0
    %vm3044 = vcmask 156672
    %v3045 = vsel %vm3044, %v3039, -inf
    %3046 = vmax.xlane.f32.xlu0 %v3045
    %v3047 = vpop.xlane.xlu0 %3046
    %v3048 = vsub.f32 %v3039, %v3047
    %v3049 = vmul.f32 %v3048, 1.442695
    %v3050 = vpow.pop %v3049
    %v3051 = vsel %vm3044, %v3050, 0.0
    %3052 = vadd.xlane.f32.xlu0 %v3051
    %v3053 = vpop.xlane.xlu0 %3052
    %v3054 = vrcp.pop %v3053
    %v3055 = vmul.f32 %v3050, %v3054
    %3056 = vst.msk [vmem:[#allocation5] sm:$0x3] %vm3044, %v3055
    // Predicated region
    $region38: #{policy_forward.1} parent=1 // pred_check
      _
    $region39: #{policy_forward.1} parent=1 // pred_check_branch
      %3058 = sbr.rel (0) target = $region41
    $region40: #{policy_forward.1} parent=1 // pred_region
      %s3060 = ssub.s32 32, 32
      %3061 = vsyncadd [#allocation4], %s3060
      %s3063 = sshll.u32 [#allocation5], 4
      %s3064 = int_to_ptr.vmem [resolvable:$true] %s3063
      %3066 = dma.vmem_to_hbm [thread:$0]  %s3064, 32, %s8, [#allocation4]
    $region41: #{policy_forward.1} parent=1 // pred_fallthru
      _
    // Predicated region
    $region42: #{policy_forward.1} parent=1 // pred_check
      _
    $region43: #{policy_forward.1} parent=1 // pred_check_branch
      %3068 = sbr.rel (0) target = $region45
    $region44: #{policy_forward.1} parent=1 // pred_region
      %3069 = dma.done [#allocation4], 32
    $region45: #{policy_forward.1} parent=1 // pred_fallthru
      _
    %3070 = vsyncpa [#allocation3], 1
    %3071 = vsyncpa [#allocation4], 1

</llo_original>
